<compile_context>
chip_gen: v5e
topology: v5e:2x2
jax: 0.10.0
libtpu: 0.0.40
codegen_flags: <defaults>
</compile_context>

<pallas_src>
import jax
import jax.numpy as jnp
from jax.experimental import pallas as pl
from jax.experimental.pallas import tpu as pltpu

EPS = 1e-5
EXPANSION = 4


# ---------------------------------------------------------------------------
# In-kernel helpers (pure jnp -> lowered by Mosaic)
# ---------------------------------------------------------------------------
def _mm(a, b):
    """(R, K) @ (K, C): bf16 operands, f32 accumulation on the MXU."""
    return jnp.dot(a, b, preferred_element_type=jnp.float32)


def _bn_scale_shift(h, count, gamma, beta):
    """Training-mode BatchNorm1d folded to per-channel (scale, shift), f32.

    Single pass: per-channel sum / sum-of-squares, then
      scale = gamma * rsqrt(var + eps),  shift = beta - mean * scale
    so applying BN is one FMA per element: h * scale + shift.
    NOTE: E[x^2]-E[x]^2 can cancel when |mean| >> std (clamped at 0); fine for
    normalized activations, switch to a two-pass sweep if tolerances tighten.
    """
    s = jnp.sum(h, axis=0, keepdims=True)              # (1, C)
    ss = jnp.sum(h * h, axis=0, keepdims=True)         # (1, C)
    inv_n = 1.0 / float(count)
    mean = s * inv_n
    var = jnp.maximum(ss * inv_n - mean * mean, 0.0)
    scale = gamma * jax.lax.rsqrt(var + EPS)
    shift = beta - mean * scale
    return scale, shift                                 # each (1, C), f32


# ---------------------------------------------------------------------------
# Pallas kernel: whole bottleneck block in one invocation (block fits VMEM)
# ---------------------------------------------------------------------------
def bottleneck_kernel(x_ref,
                      w1d_ref, g1_ref, be1_ref,
                      w2_ref, g2_ref, be2_ref,
                      w3_ref, g3_ref, be3_ref,
                      gd_ref, bed_ref,
                      o_ref):
    n, l, cin = x_ref.shape
    rows = n * l
    width = g1_ref.shape[1]
    x2 = x_ref[...].reshape(rows, cin)                  # bf16 (N*L, Cin)

    # conv1 (1x1) and the projection shortcut share the same LHS -> one fused
    # matmul against [w1 | wd]; column split is lane-aligned when width%128==0.
    h01 = _mm(x2, w1d_ref[...])                         # f32 (rows, width+out_ch)
    h = h01[:, :width]
    idn = h01[:, width:]

    # bn1 + relu (f32 elementwise)
    sc, sh = _bn_scale_shift(h, rows, g1_ref[...], be1_ref[...])
    h = jnp.maximum(h * sc + sh, 0.0)

    # conv2 (k=3, padding=1) + bn2 + relu: build [x[t-1] | x[t] | x[t+1]] as a
    # single bf16 (rows, 3*width) LHS and issue ONE matmul with K = 3*width.
    # Shifts are XLU sublane rolls with non-negative shifts (+1 and rows-1).
    # Rolling the flattened (N*L, C) rows is safe: the only rows that wrap
    # across batch boundaries are exactly the rows masked to zero
    # (t == 0 for the previous-tap, t == L-1 for the next-tap).
    t_col = jax.lax.broadcasted_iota(jnp.int32, (n, l, 1), 1).reshape(rows, 1)
    prev_tap = jnp.where(t_col == 0, 0.0,
                         pltpu.roll(h, shift=1, axis=0)).astype(jnp.bfloat16)
    next_tap = jnp.where(t_col == l - 1, 0.0,
                         pltpu.roll(h, shift=rows - 1, axis=0)).astype(jnp.bfloat16)
    lhs = jnp.concatenate([prev_tap, h.astype(jnp.bfloat16), next_tap], axis=1)
    h2 = _mm(lhs, w2_ref[...])                          # f32 (rows, width)
    sc, sh = _bn_scale_shift(h2, rows, g2_ref[...], be2_ref[...])
    h2 = jnp.maximum(h2 * sc + sh, 0.0)

    # conv3 (1x1) + bn3 (no relu yet)
    h3 = _mm(h2.astype(jnp.bfloat16), w3_ref[...])      # f32 (rows, out_ch)
    s3, t3 = _bn_scale_shift(h3, rows, g3_ref[...], be3_ref[...])

    # projection-shortcut BN
    sd, td = _bn_scale_shift(idn, rows, gd_ref[...], bed_ref[...])

    out = jnp.maximum((h3 * s3 + t3) + (idn * sd + td), 0.0)
    o_ref[...] = out.reshape(n, l, -1).astype(o_ref.dtype)


# ---------------------------------------------------------------------------
# Wrapper: NLC bf16 in -> NLC bf16 out (no layout churn around the kernel)
# ---------------------------------------------------------------------------
def _vmem_limit_bytes():
    # Generation-aware budget: physical VMEM minus headroom, capped at 112 MiB
    # (v5e/v6e: 128 MiB -> 112 MiB; v7x: 64 MiB -> 48 MiB).
    try:
        cap = int(pltpu.get_tpu_info().vmem_capacity_bytes)
    except Exception:
        return 48 * 1024 * 1024
    return int(min(max(cap - 16 * 1024 * 1024, 32 * 1024 * 1024),
                   112 * 1024 * 1024))


def bottleneck_forward(x_nlc, kp):
    """x_nlc: (N, L, Cin) bf16, channels-last. Returns (N, L, out_ch) bf16."""
    n, l, cin = x_nlc.shape
    width = kp["g1"].shape[1]
    c_out = kp["g3"].shape[1]

    args = (x_nlc,
            kp["w1d"], kp["g1"], kp["be1"],
            kp["w2"], kp["g2"], kp["be2"],
            kp["w3"], kp["g3"], kp["be3"],
            kp["gd"], kp["bed"])

    rows = n * l
    flops = 2 * rows * (cin * (width + c_out) + 3 * width * width + width * c_out)
    bytes_accessed = int(
        x_nlc.size * x_nlc.dtype.itemsize                # bf16 input
        + rows * c_out * 2                               # bf16 output
        + sum(int(v.size) * v.dtype.itemsize for v in kp.values()))
    transcendentals = 2 * (width + c_out)                # rsqrt per BN channel

    return pl.pallas_call(
        bottleneck_kernel,
        out_shape=jax.ShapeDtypeStruct((n, l, c_out), jnp.bfloat16),
        in_specs=[pl.BlockSpec(memory_space=pltpu.MemorySpace.VMEM)] * len(args),
        out_specs=pl.BlockSpec(memory_space=pltpu.MemorySpace.VMEM),
        compiler_params=pltpu.CompilerParams(
            vmem_limit_bytes=_vmem_limit_bytes()),
        cost_estimate=pl.CostEstimate(flops=flops,
                                      transcendentals=transcendentals,
                                      bytes_accessed=bytes_accessed),
    )(*args)


def bottleneck_forward_ncl(x_ncl, kp):
    """PyTorch-layout (NCL) drop-in.  Costs two extra HBM-bound transposes;
    prefer calling bottleneck_forward with NLC bf16 activations end-to-end."""
    out = bottleneck_forward(
        jnp.transpose(x_ncl, (0, 2, 1)).astype(jnp.bfloat16), kp)
    return jnp.transpose(out, (0, 2, 1))


# ---------------------------------------------------------------------------
# Deterministic parameter init (PyTorch layouts: conv weight (O, I, K), bias (C,))
# ---------------------------------------------------------------------------
def init_params(key, inplanes, planes, base_width=64):
    width = int(planes * (base_width / 64.0))
    out_ch = planes * EXPANSION
    ks = list(jax.random.split(key, 16))

    def rnd(k, shape, scale=0.1):
        return (scale * jax.random.normal(k, shape)).astype(jnp.float32)

    def rnd_bf(k, shape, scale=0.1):
        # Conv weights are made exactly bf16-representable so the bf16 kernel
        # and the f32 reference see numerically identical weights.
        return rnd(k, shape, scale).astype(jnp.bfloat16).astype(jnp.float32)

    return {
        "w1": rnd_bf(ks[0], (width, inplanes, 1)),   "b1": rnd(ks[1], (width,)),
        "g1": 1.0 + rnd(ks[2], (width,)),            "be1": rnd(ks[3], (width,)),
        "w2": rnd_bf(ks[4], (width, width, 3)),      "b2": rnd(ks[5], (width,)),
        "g2": 1.0 + rnd(ks[6], (width,)),            "be2": rnd(ks[7], (width,)),
        "w3": rnd_bf(ks[8], (out_ch, width, 1)),     "b3": rnd(ks[9], (out_ch,)),
        "g3": 1.0 + rnd(ks[10], (out_ch,)),          "be3": rnd(ks[11], (out_ch,)),
        "wd": rnd_bf(ks[12], (out_ch, inplanes, 1)), "bd": rnd(ks[13], (out_ch,)),
        "gd": 1.0 + rnd(ks[14], (out_ch,)),          "bed": rnd(ks[15], (out_ch,)),
    }


def to_kernel_params(p):
    """PyTorch layouts -> kernel layouts (channels-last, bf16 MXU operands).

    * w1 and the downsample weight wd are concatenated along the output dim
      (conv1 + shortcut share one matmul; split lane-aligned if width%128==0).
    * w2's three taps are stacked along the contraction dim (3*width) to match
      the [x[t-1] | x[t] | x[t+1]] LHS.
    * Conv biases are intentionally NOT forwarded: every conv is immediately
      followed by training-mode BatchNorm, so the biases cancel exactly.
    """
    bf = jnp.bfloat16
    w1_t = jnp.transpose(p["w1"][:, :, 0])               # (Cin, width)
    wd_t = jnp.transpose(p["wd"][:, :, 0])               # (Cin, out_ch)
    w2_t = [jnp.transpose(p["w2"][:, :, k]) for k in range(3)]   # (width, width)
    k = {
        "w1d": jnp.concatenate([w1_t, wd_t], axis=1).astype(bf),   # (Cin, width+out_ch)
        "w2": jnp.concatenate(w2_t, axis=0).astype(bf),             # (3*width, width)
        "w3": jnp.transpose(p["w3"][:, :, 0]).astype(bf),           # (width, out_ch)
    }
    for name in ("g1", "be1", "g2", "be2", "g3", "be3", "gd", "bed"):
        k[name] = p[name].reshape(1, -1).astype(jnp.float32)        # (1, C)
    return k


# ---------------------------------------------------------------------------
# Independent pure-JAX reference (NCL, real conv, f32, with biases)
# ---------------------------------------------------------------------------
def reference_forward(x, p):
    def conv1d(h, w, b, padding):
        y = jax.lax.conv_general_dilated(
            h, w, window_strides=(1,), padding=[(padding, padding)],
            dimension_numbers=("NCH", "OIH", "NCH"))
        return y + b[None, :, None]

    def bn(h, g, be):
        mean = jnp.mean(h, axis=(0, 2), keepdims=True)
        var = jnp.mean((h - mean) ** 2, axis=(0, 2), keepdims=True)
        return (h - mean) * jax.lax.rsqrt(var + EPS) * g[None, :, None] + be[None, :, None]

    out = jax.nn.relu(bn(conv1d(x, p["w1"], p["b1"], 0), p["g1"], p["be1"]))
    out = jax.nn.relu(bn(conv1d(out, p["w2"], p["b2"], 1), p["g2"], p["be2"]))
    out = bn(conv1d(out, p["w3"], p["b3"], 0), p["g3"], p["be3"])
    idn = bn(conv1d(x, p["wd"], p["bd"], 0), p["gd"], p["bed"])
    return jax.nn.relu(out + idn)


if __name__ == "__main__":
    key = jax.random.PRNGKey(0)
    # inplanes != planes -> projection shortcut (the module's Identity branch
    # needs inplanes == planes, which then mismatches the residual channel
    # count planes*4, so the projection path is the only functional config).
    # base_width=256 -> width=128, out_ch=128: lane-dense channels so the
    # conv1/shortcut column split, the tap-stacked conv2 LHS and the output
    # store are all lane-aligned and unmasked.
    N, inplanes, planes, base_width, L = 2, 64, 32, 256, 128
    kx, kp_key = jax.random.split(key)

    x_nlc_f32 = jax.random.normal(kx, (N, L, inplanes), jnp.float32)
    x_nlc = x_nlc_f32.astype(jnp.bfloat16)               # kernel input: NLC bf16
    params = init_params(kp_key, inplanes, planes, base_width)
    kparams = to_kernel_params(params)

    out = bottleneck_forward(x_nlc, kparams)
    out = jax.block_until_ready(out)

    out_ch = planes * EXPANSION
    assert out.shape == (N, L, out_ch), out.shape
    assert out.dtype == jnp.bfloat16, out.dtype

    # Reference on the same bf16-representable input/weights, full f32 math.
    x_ncl = jnp.transpose(x_nlc.astype(jnp.float32), (0, 2, 1))
    ref_nlc = jnp.transpose(reference_forward(x_ncl, params), (0, 2, 1))

    out_f32 = out.astype(jnp.float32)
    max_err = float(jnp.max(jnp.abs(out_f32 - ref_nlc)))
    # bf16 intermediates + bf16 output vs. pure-f32 reference.
    assert jnp.allclose(out_f32, ref_nlc, atol=5e-2, rtol=5e-2), max_err

    print("KERNEL_OK")
</pallas_src>

<mosaic_0001>
module attributes {stable_mosaic.version = 11 : i64} {
  func.func @bottleneck_kernel(%arg0: memref<2x128x64xbf16, #tpu.memory_space<vmem>>, %arg1: memref<64x256xbf16, #tpu.memory_space<vmem>>, %arg2: memref<1x128xf32, #tpu.memory_space<vmem>>, %arg3: memref<1x128xf32, #tpu.memory_space<vmem>>, %arg4: memref<384x128xbf16, #tpu.memory_space<vmem>>, %arg5: memref<1x128xf32, #tpu.memory_space<vmem>>, %arg6: memref<1x128xf32, #tpu.memory_space<vmem>>, %arg7: memref<128x128xbf16, #tpu.memory_space<vmem>>, %arg8: memref<1x128xf32, #tpu.memory_space<vmem>>, %arg9: memref<1x128xf32, #tpu.memory_space<vmem>>, %arg10: memref<1x128xf32, #tpu.memory_space<vmem>>, %arg11: memref<1x128xf32, #tpu.memory_space<vmem>>, %arg12: memref<2x128x128xbf16, #tpu.memory_space<vmem>>) attributes {dimension_semantics = [], scalar_prefetch = 0 : i64, scratch_operands = 0 : i64, tpu.core_type = #tpu.core_type<tc>} {
    %c0 = arith.constant 0 : index
    %c0_0 = arith.constant 0 : index
    %c0_1 = arith.constant 0 : index
    %0 = vector.load %arg0[%c0, %c0_0, %c0_1] : memref<2x128x64xbf16, #tpu.memory_space<vmem>>, vector<2x128x64xbf16>
    %1 = vector.shape_cast %0 : vector<2x128x64xbf16> to vector<256x64xbf16>
    %c0_2 = arith.constant 0 : index
    %c0_3 = arith.constant 0 : index
    %2 = vector.load %arg1[%c0_2, %c0_3] : memref<64x256xbf16, #tpu.memory_space<vmem>>, vector<64x256xbf16>
    %cst = arith.constant dense<0.000000e+00> : vector<256x256xf32>
    %3 = tpu.matmul %1, %2, %cst {dimension_numbers = #tpu.dot_dimension_numbers<[1], [0], [0], [1], [0, 0, 1, 1], [], []>} : vector<256x64xbf16>, vector<64x256xbf16>, vector<256x256xf32> -> vector<256x256xf32>
    %4 = vector.extract_strided_slice %3 {offsets = [0, 0], sizes = [256, 128], strides = [1, 1]} : vector<256x256xf32> to vector<256x128xf32>
    %5 = vector.extract_strided_slice %3 {offsets = [0, 128], sizes = [256, 128], strides = [1, 1]} : vector<256x256xf32> to vector<256x128xf32>
    %c0_4 = arith.constant 0 : index
    %c0_5 = arith.constant 0 : index
    %6 = vector.load %arg2[%c0_4, %c0_5] : memref<1x128xf32, #tpu.memory_space<vmem>>, vector<1x128xf32>
    %c0_6 = arith.constant 0 : index
    %c0_7 = arith.constant 0 : index
    %7 = vector.load %arg3[%c0_6, %c0_7] : memref<1x128xf32, #tpu.memory_space<vmem>>, vector<1x128xf32>
    %cst_8 = arith.constant dense<0.000000e+00> : vector<128xf32>
    %8 = vector.multi_reduction <add>, %4, %cst_8 [0] : vector<256x128xf32> to vector<128xf32>
    %9 = vector.shape_cast %8 : vector<128xf32> to vector<1x128xf32>
    %10 = arith.mulf %4, %4 : vector<256x128xf32>
    %cst_9 = arith.constant dense<0.000000e+00> : vector<128xf32>
    %11 = vector.multi_reduction <add>, %10, %cst_9 [0] : vector<256x128xf32> to vector<128xf32>
    %12 = vector.shape_cast %11 : vector<128xf32> to vector<1x128xf32>
    %cst_10 = arith.constant 3.906250e-03 : f32
    %13 = vector.broadcast %cst_10 : f32 to vector<1x128xf32>
    %14 = arith.mulf %9, %13 : vector<1x128xf32>
    %cst_11 = arith.constant 3.906250e-03 : f32
    %15 = vector.broadcast %cst_11 : f32 to vector<1x128xf32>
    %16 = arith.mulf %12, %15 : vector<1x128xf32>
    %17 = arith.mulf %14, %14 : vector<1x128xf32>
    %18 = arith.subf %16, %17 : vector<1x128xf32>
    %cst_12 = arith.constant 0.000000e+00 : f32
    %19 = vector.broadcast %cst_12 : f32 to vector<1x128xf32>
    %20 = arith.maximumf %18, %19 : vector<1x128xf32>
    %cst_13 = arith.constant 9.99999974E-6 : f32
    %21 = vector.broadcast %cst_13 : f32 to vector<1x128xf32>
    %22 = arith.addf %20, %21 : vector<1x128xf32>
    %23 = math.rsqrt %22 : vector<1x128xf32>
    %24 = arith.mulf %6, %23 : vector<1x128xf32>
    %25 = arith.mulf %14, %24 : vector<1x128xf32>
    %26 = arith.subf %7, %25 : vector<1x128xf32>
    %27 = vector.broadcast %24 : vector<1x128xf32> to vector<256x128xf32>
    %28 = arith.mulf %4, %27 : vector<256x128xf32>
    %29 = vector.broadcast %26 : vector<1x128xf32> to vector<256x128xf32>
    %30 = arith.addf %28, %29 : vector<256x128xf32>
    %cst_14 = arith.constant 0.000000e+00 : f32
    %31 = vector.broadcast %cst_14 : f32 to vector<256x128xf32>
    %32 = arith.maximumf %30, %31 : vector<256x128xf32>
    %33 = tpu.iota {dimensions = array<i32: 1>} : vector<2x128x1xi32>
    %34 = vector.shape_cast %33 : vector<2x128x1xi32> to vector<256x1xi32>
    %c0_i32 = arith.constant 0 : i32
    %35 = vector.broadcast %c0_i32 : i32 to vector<256x1xi32>
    %36 = arith.cmpi eq, %34, %35 : vector<256x1xi32>
    %c1_i32 = arith.constant 1 : i32
    %37 = tpu.dynamic_rotate %32 by %c1_i32 dim 0 : vector<256x128xf32>, i32 -> vector<256x128xf32>
    %cst_15 = arith.constant 0.000000e+00 : f32
    %38 = vector.shape_cast %36 : vector<256x1xi1> to vector<256x1xi1>
    %39 = vector.broadcast %38 : vector<256x1xi1> to vector<256x128xi1>
    %40 = vector.broadcast %cst_15 : f32 to vector<256x128xf32>
    %41 = arith.select %39, %40, %37 : vector<256x128xi1>, vector<256x128xf32>
    %42 = arith.truncf %41 : vector<256x128xf32> to vector<256x128xbf16>
    %c127_i32 = arith.constant 127 : i32
    %43 = vector.broadcast %c127_i32 : i32 to vector<256x1xi32>
    %44 = arith.cmpi eq, %34, %43 : vector<256x1xi32>
    %c255_i32 = arith.constant 255 : i32
    %45 = tpu.dynamic_rotate %32 by %c255_i32 dim 0 : vector<256x128xf32>, i32 -> vector<256x128xf32>
    %cst_16 = arith.constant 0.000000e+00 : f32
    %46 = vector.shape_cast %44 : vector<256x1xi1> to vector<256x1xi1>
    %47 = vector.broadcast %46 : vector<256x1xi1> to vector<256x128xi1>
    %48 = vector.broadcast %cst_16 : f32 to vector<256x128xf32>
    %49 = arith.select %47, %48, %45 : vector<256x128xi1>, vector<256x128xf32>
    %50 = arith.truncf %49 : vector<256x128xf32> to vector<256x128xbf16>
    %51 = arith.truncf %32 : vector<256x128xf32> to vector<256x128xbf16>
    %52 = tpu.concatenate %42, %51, %50 in 1 : vector<256x128xbf16>, vector<256x128xbf16>, vector<256x128xbf16> -> vector<256x384xbf16>
    %c0_17 = arith.constant 0 : index
    %c0_18 = arith.constant 0 : index
    %53 = vector.load %arg4[%c0_17, %c0_18] : memref<384x128xbf16, #tpu.memory_space<vmem>>, vector<384x128xbf16>
    %cst_19 = arith.constant dense<0.000000e+00> : vector<256x128xf32>
    %54 = tpu.matmul %52, %53, %cst_19 {dimension_numbers = #tpu.dot_dimension_numbers<[1], [0], [0], [1], [0, 0, 1, 1], [], []>} : vector<256x384xbf16>, vector<384x128xbf16>, vector<256x128xf32> -> vector<256x128xf32>
    %c0_20 = arith.constant 0 : index
    %c0_21 = arith.constant 0 : index
    %55 = vector.load %arg5[%c0_20, %c0_21] : memref<1x128xf32, #tpu.memory_space<vmem>>, vector<1x128xf32>
    %c0_22 = arith.constant 0 : index
    %c0_23 = arith.constant 0 : index
    %56 = vector.load %arg6[%c0_22, %c0_23] : memref<1x128xf32, #tpu.memory_space<vmem>>, vector<1x128xf32>
    %cst_24 = arith.constant dense<0.000000e+00> : vector<128xf32>
    %57 = vector.multi_reduction <add>, %54, %cst_24 [0] : vector<256x128xf32> to vector<128xf32>
    %58 = vector.shape_cast %57 : vector<128xf32> to vector<1x128xf32>
    %59 = arith.mulf %54, %54 : vector<256x128xf32>
    %cst_25 = arith.constant dense<0.000000e+00> : vector<128xf32>
    %60 = vector.multi_reduction <add>, %59, %cst_25 [0] : vector<256x128xf32> to vector<128xf32>
    %61 = vector.shape_cast %60 : vector<128xf32> to vector<1x128xf32>
    %cst_26 = arith.constant 3.906250e-03 : f32
    %62 = vector.broadcast %cst_26 : f32 to vector<1x128xf32>
    %63 = arith.mulf %58, %62 : vector<1x128xf32>
    %cst_27 = arith.constant 3.906250e-03 : f32
    %64 = vector.broadcast %cst_27 : f32 to vector<1x128xf32>
    %65 = arith.mulf %61, %64 : vector<1x128xf32>
    %66 = arith.mulf %63, %63 : vector<1x128xf32>
    %67 = arith.subf %65, %66 : vector<1x128xf32>
    %cst_28 = arith.constant 0.000000e+00 : f32
    %68 = vector.broadcast %cst_28 : f32 to vector<1x128xf32>
    %69 = arith.maximumf %67, %68 : vector<1x128xf32>
    %cst_29 = arith.constant 9.99999974E-6 : f32
    %70 = vector.broadcast %cst_29 : f32 to vector<1x128xf32>
    %71 = arith.addf %69, %70 : vector<1x128xf32>
    %72 = math.rsqrt %71 : vector<1x128xf32>
    %73 = arith.mulf %55, %72 : vector<1x128xf32>
    %74 = arith.mulf %63, %73 : vector<1x128xf32>
    %75 = arith.subf %56, %74 : vector<1x128xf32>
    %76 = vector.broadcast %73 : vector<1x128xf32> to vector<256x128xf32>
    %77 = arith.mulf %54, %76 : vector<256x128xf32>
    %78 = vector.broadcast %75 : vector<1x128xf32> to vector<256x128xf32>
    %79 = arith.addf %77, %78 : vector<256x128xf32>
    %cst_30 = arith.constant 0.000000e+00 : f32
    %80 = vector.broadcast %cst_30 : f32 to vector<256x128xf32>
    %81 = arith.maximumf %79, %80 : vector<256x128xf32>
    %82 = arith.truncf %81 : vector<256x128xf32> to vector<256x128xbf16>
    %c0_31 = arith.constant 0 : index
    %c0_32 = arith.constant 0 : index
    %83 = vector.load %arg7[%c0_31, %c0_32] : memref<128x128xbf16, #tpu.memory_space<vmem>>, vector<128x128xbf16>
    %cst_33 = arith.constant dense<0.000000e+00> : vector<256x128xf32>
    %84 = tpu.matmul %82, %83, %cst_33 {dimension_numbers = #tpu.dot_dimension_numbers<[1], [0], [0], [1], [0, 0, 1, 1], [], []>} : vector<256x128xbf16>, vector<128x128xbf16>, vector<256x128xf32> -> vector<256x128xf32>
    %c0_34 = arith.constant 0 : index
    %c0_35 = arith.constant 0 : index
    %85 = vector.load %arg8[%c0_34, %c0_35] : memref<1x128xf32, #tpu.memory_space<vmem>>, vector<1x128xf32>
    %c0_36 = arith.constant 0 : index
    %c0_37 = arith.constant 0 : index
    %86 = vector.load %arg9[%c0_36, %c0_37] : memref<1x128xf32, #tpu.memory_space<vmem>>, vector<1x128xf32>
    %cst_38 = arith.constant dense<0.000000e+00> : vector<128xf32>
    %87 = vector.multi_reduction <add>, %84, %cst_38 [0] : vector<256x128xf32> to vector<128xf32>
    %88 = vector.shape_cast %87 : vector<128xf32> to vector<1x128xf32>
    %89 = arith.mulf %84, %84 : vector<256x128xf32>
    %cst_39 = arith.constant dense<0.000000e+00> : vector<128xf32>
    %90 = vector.multi_reduction <add>, %89, %cst_39 [0] : vector<256x128xf32> to vector<128xf32>
    %91 = vector.shape_cast %90 : vector<128xf32> to vector<1x128xf32>
    %cst_40 = arith.constant 3.906250e-03 : f32
    %92 = vector.broadcast %cst_40 : f32 to vector<1x128xf32>
    %93 = arith.mulf %88, %92 : vector<1x128xf32>
    %cst_41 = arith.constant 3.906250e-03 : f32
    %94 = vector.broadcast %cst_41 : f32 to vector<1x128xf32>
    %95 = arith.mulf %91, %94 : vector<1x128xf32>
    %96 = arith.mulf %93, %93 : vector<1x128xf32>
    %97 = arith.subf %95, %96 : vector<1x128xf32>
    %cst_42 = arith.constant 0.000000e+00 : f32
    %98 = vector.broadcast %cst_42 : f32 to vector<1x128xf32>
    %99 = arith.maximumf %97, %98 : vector<1x128xf32>
    %cst_43 = arith.constant 9.99999974E-6 : f32
    %100 = vector.broadcast %cst_43 : f32 to vector<1x128xf32>
    %101 = arith.addf %99, %100 : vector<1x128xf32>
    %102 = math.rsqrt %101 : vector<1x128xf32>
    %103 = arith.mulf %85, %102 : vector<1x128xf32>
    %104 = arith.mulf %93, %103 : vector<1x128xf32>
    %105 = arith.subf %86, %104 : vector<1x128xf32>
    %c0_44 = arith.constant 0 : index
    %c0_45 = arith.constant 0 : index
    %106 = vector.load %arg10[%c0_44, %c0_45] : memref<1x128xf32, #tpu.memory_space<vmem>>, vector<1x128xf32>
    %c0_46 = arith.constant 0 : index
    %c0_47 = arith.constant 0 : index
    %107 = vector.load %arg11[%c0_46, %c0_47] : memref<1x128xf32, #tpu.memory_space<vmem>>, vector<1x128xf32>
    %cst_48 = arith.constant dense<0.000000e+00> : vector<128xf32>
    %108 = vector.multi_reduction <add>, %5, %cst_48 [0] : vector<256x128xf32> to vector<128xf32>
    %109 = vector.shape_cast %108 : vector<128xf32> to vector<1x128xf32>
    %110 = arith.mulf %5, %5 : vector<256x128xf32>
    %cst_49 = arith.constant dense<0.000000e+00> : vector<128xf32>
    %111 = vector.multi_reduction <add>, %110, %cst_49 [0] : vector<256x128xf32> to vector<128xf32>
    %112 = vector.shape_cast %111 : vector<128xf32> to vector<1x128xf32>
    %cst_50 = arith.constant 3.906250e-03 : f32
    %113 = vector.broadcast %cst_50 : f32 to vector<1x128xf32>
    %114 = arith.mulf %109, %113 : vector<1x128xf32>
    %cst_51 = arith.constant 3.906250e-03 : f32
    %115 = vector.broadcast %cst_51 : f32 to vector<1x128xf32>
    %116 = arith.mulf %112, %115 : vector<1x128xf32>
    %117 = arith.mulf %114, %114 : vector<1x128xf32>
    %118 = arith.subf %116, %117 : vector<1x128xf32>
    %cst_52 = arith.constant 0.000000e+00 : f32
    %119 = vector.broadcast %cst_52 : f32 to vector<1x128xf32>
    %120 = arith.maximumf %118, %119 : vector<1x128xf32>
    %cst_53 = arith.constant 9.99999974E-6 : f32
    %121 = vector.broadcast %cst_53 : f32 to vector<1x128xf32>
    %122 = arith.addf %120, %121 : vector<1x128xf32>
    %123 = math.rsqrt %122 : vector<1x128xf32>
    %124 = arith.mulf %106, %123 : vector<1x128xf32>
    %125 = arith.mulf %114, %124 : vector<1x128xf32>
    %126 = arith.subf %107, %125 : vector<1x128xf32>
    %127 = vector.broadcast %103 : vector<1x128xf32> to vector<256x128xf32>
    %128 = arith.mulf %84, %127 : vector<256x128xf32>
    %129 = vector.broadcast %105 : vector<1x128xf32> to vector<256x128xf32>
    %130 = arith.addf %128, %129 : vector<256x128xf32>
    %131 = vector.broadcast %124 : vector<1x128xf32> to vector<256x128xf32>
    %132 = arith.mulf %5, %131 : vector<256x128xf32>
    %133 = vector.broadcast %126 : vector<1x128xf32> to vector<256x128xf32>
    %134 = arith.addf %132, %133 : vector<256x128xf32>
    %135 = arith.addf %130, %134 : vector<256x128xf32>
    %cst_54 = arith.constant 0.000000e+00 : f32
    %136 = vector.broadcast %cst_54 : f32 to vector<256x128xf32>
    %137 = arith.maximumf %135, %136 : vector<256x128xf32>
    %138 = vector.shape_cast %137 : vector<256x128xf32> to vector<2x128x128xf32>
    %139 = arith.truncf %138 : vector<2x128x128xf32> to vector<2x128x128xbf16>
    %c0_55 = arith.constant 0 : index
    %c0_56 = arith.constant 0 : index
    %c0_57 = arith.constant 0 : index
    %140 = vector.load %arg12[%c0_55, %c0_56, %c0_57] : memref<2x128x128xbf16, #tpu.memory_space<vmem>>, vector<2x128x128xbf16>
    tpu.vector_store %arg12[%c0_55, %c0_56, %c0_57], %139 {strides = array<i32>} : memref<2x128x128xbf16, #tpu.memory_space<vmem>>, vector<2x128x128xbf16>,
    return
  }
}

</mosaic_0001>

<llo_original>
// kernel: tpu_custom_call.1
$region0: #{tpu_custom_call.1}
  #allocation0 [shape = 'u32[]', space=smem, size = 0x4, offset = 0x4, fixed_abs, tag = 'smem constant byte address 0x4 - core index']
  #allocation1 [shape = 'u32[72,128]{1,0:T(1,128)}', space=vmem, size = 0x9000, scoped, tag = 'internal scratch']
  %s0 = inlined_call_operand.vmem [shape: bf16[2,128,64], index: 0, kind: input, shape index: {}]
  %s1 = inlined_call_operand.hbm [shape: bf16[64,256], index: 1, kind: input, shape index: {}]
  %s2 = inlined_call_operand.vmem [shape: f32[1,128], index: 2, kind: input, shape index: {}]
  %s3 = inlined_call_operand.vmem [shape: f32[1,128], index: 3, kind: input, shape index: {}]
  %s4 = inlined_call_operand.vmem [shape: bf16[384,128], index: 4, kind: input, shape index: {}]
  %s5 = inlined_call_operand.vmem [shape: f32[1,128], index: 5, kind: input, shape index: {}]
  %s6 = inlined_call_operand.vmem [shape: f32[1,128], index: 6, kind: input, shape index: {}]
  %s7 = inlined_call_operand.hbm [shape: bf16[128,128], index: 7, kind: input, shape index: {}]
  %s8 = inlined_call_operand.vmem [shape: f32[1,128], index: 8, kind: input, shape index: {}]
  %s9 = inlined_call_operand.vmem [shape: f32[1,128], index: 9, kind: input, shape index: {}]
  %s10 = inlined_call_operand.vmem [shape: f32[1,128], index: 10, kind: input, shape index: {}]
  %s11 = inlined_call_operand.vmem [shape: f32[1,128], index: 11, kind: input, shape index: {}]
  %s12 = inlined_call_operand.hbm [shape: bf16[2,128,128], index: 12, kind: output, shape index: {}]
  %s13 = sld [smem:[#allocation0]]
  $region66: #{tpu_custom_call.1} parent=0
    _
  %s15 = ssub.s32 1, %s13
  %s16 = scalar_select 0, %s15, %s13
  $region1: #{tpu_custom_call.1} parent=0
    #allocation2 [shape = 'u8[32768]{0}', space=vmem, size = 0x8000, scoped, tag = 'input window, operand 1, single buffered']
    #allocation3 [shape = 's32[1]{0}', space=sflag, size = 0x4, scoped, tag = 'scoped memory for tpu_custom_call.1']
    #allocation4 [shape = 's32[1]{0}', space=sflag, size = 0x4, scoped, tag = 'scoped memory for tpu_custom_call.1']
    #allocation5 [shape = 'u8[32768]{0}', space=vmem, size = 0x8000, scoped, tag = 'input window, operand 7, single buffered']
    #allocation6 [shape = 's32[1]{0}', space=sflag, size = 0x4, scoped, tag = 'scoped memory for tpu_custom_call.1']
    #allocation7 [shape = 'u8[65536]{0}', space=vmem, size = 0x10000, scoped, tag = 'output window, operand 0, single buffered']
    %17 = vsyncpa [#allocation3], 0
    %18 = vsyncpa [#allocation6], 0
    %19 = vsyncpa [#allocation4], 0
    // Predicated region
    $region2: #{tpu_custom_call.1} parent=1 // pred_check
      _
    $region3: #{tpu_custom_call.1} parent=1 // pred_check_branch
      %21 = sbr.rel (0) target = $region5
    $region4: #{tpu_custom_call.1} parent=1 // pred_region
      _
    $region5: #{tpu_custom_call.1} parent=1 // pred_fallthru
      _
    // Predicated region
    $region6: #{tpu_custom_call.1} parent=1 // pred_check
      _
    $region7: #{tpu_custom_call.1} parent=1 // pred_check_branch
      %23 = sbr.rel (0) target = $region9
    $region8: #{tpu_custom_call.1} parent=1 // pred_region
      %25 = vsyncadd [#allocation3], 0
      %s26 = sshll.u32 %s1, 4
      %s27 = int_to_ptr.hbm [resolvable:$true] %s26
      %s28 = sshll.u32 [#allocation2], 4
      %s29 = int_to_ptr.vmem [resolvable:$true] %s28
      %34 = dma.hbm_to_vmem [thread:$0]  %s27, 1024, %s29, [#allocation3], 128, 128, 8
    $region9: #{tpu_custom_call.1} parent=1 // pred_fallthru
      _
    // Predicated region
    $region10: #{tpu_custom_call.1} parent=1 // pred_check
      _
    $region11: #{tpu_custom_call.1} parent=1 // pred_check_branch
      %36 = sbr.rel (0) target = $region13
    $region12: #{tpu_custom_call.1} parent=1 // pred_region
      _
    $region13: #{tpu_custom_call.1} parent=1 // pred_fallthru
      _
    // Predicated region
    $region14: #{tpu_custom_call.1} parent=1 // pred_check
      _
    $region15: #{tpu_custom_call.1} parent=1 // pred_check_branch
      %38 = sbr.rel (0) target = $region17
    $region16: #{tpu_custom_call.1} parent=1 // pred_region
      _
    $region17: #{tpu_custom_call.1} parent=1 // pred_fallthru
      _
    // Predicated region
    $region18: #{tpu_custom_call.1} parent=1 // pred_check
      _
    $region19: #{tpu_custom_call.1} parent=1 // pred_check_branch
      %40 = sbr.rel (0) target = $region21
    $region20: #{tpu_custom_call.1} parent=1 // pred_region
      _
    $region21: #{tpu_custom_call.1} parent=1 // pred_fallthru
      _
    // Predicated region
    $region22: #{tpu_custom_call.1} parent=1 // pred_check
      _
    $region23: #{tpu_custom_call.1} parent=1 // pred_check_branch
      %42 = sbr.rel (0) target = $region25
    $region24: #{tpu_custom_call.1} parent=1 // pred_region
      _
    $region25: #{tpu_custom_call.1} parent=1 // pred_fallthru
      _
    // Predicated region
    $region26: #{tpu_custom_call.1} parent=1 // pred_check
      _
    $region27: #{tpu_custom_call.1} parent=1 // pred_check_branch
      %44 = sbr.rel (0) target = $region29
    $region28: #{tpu_custom_call.1} parent=1 // pred_region
      _
    $region29: #{tpu_custom_call.1} parent=1 // pred_fallthru
      _
    // Predicated region
    $region30: #{tpu_custom_call.1} parent=1 // pred_check
      _
    $region31: #{tpu_custom_call.1} parent=1 // pred_check_branch
      %46 = sbr.rel (0) target = $region33
    $region32: #{tpu_custom_call.1} parent=1 // pred_region
      %48 = vsyncadd [#allocation6], 0
      %s49 = sshll.u32 %s7, 4
      %s50 = int_to_ptr.hbm [resolvable:$true] %s49
      %s51 = sshll.u32 [#allocation5], 4
      %s52 = int_to_ptr.vmem [resolvable:$true] %s51
      %57 = dma.hbm_to_vmem [thread:$0]  %s50, 1024, %s52, [#allocation6], 64, 64, 4
    $region33: #{tpu_custom_call.1} parent=1 // pred_fallthru
      _
    // Predicated region
    $region34: #{tpu_custom_call.1} parent=1 // pred_check
      _
    $region35: #{tpu_custom_call.1} parent=1 // pred_check_branch
      %59 = sbr.rel (0) target = $region37
    $region36: #{tpu_custom_call.1} parent=1 // pred_region
      _
    $region37: #{tpu_custom_call.1} parent=1 // pred_fallthru
      _
    // Predicated region
    $region38: #{tpu_custom_call.1} parent=1 // pred_check
      _
    $region39: #{tpu_custom_call.1} parent=1 // pred_check_branch
      %61 = sbr.rel (0) target = $region41
    $region40: #{tpu_custom_call.1} parent=1 // pred_region
      _
    $region41: #{tpu_custom_call.1} parent=1 // pred_fallthru
      _
    // Predicated region
    $region42: #{tpu_custom_call.1} parent=1 // pred_check
      _
    $region43: #{tpu_custom_call.1} parent=1 // pred_check_branch
      %63 = sbr.rel (0) target = $region45
    $region44: #{tpu_custom_call.1} parent=1 // pred_region
      _
    $region45: #{tpu_custom_call.1} parent=1 // pred_fallthru
      _
    // Predicated region
    $region46: #{tpu_custom_call.1} parent=1 // pred_check
      _
    $region47: #{tpu_custom_call.1} parent=1 // pred_check_branch
      %65 = sbr.rel (0) target = $region49
    $region48: #{tpu_custom_call.1} parent=1 // pred_region
      _
    $region49: #{tpu_custom_call.1} parent=1 // pred_fallthru
      _
    // Predicated region
    $region50: #{tpu_custom_call.1} parent=1 // pred_check
      _
    $region51: #{tpu_custom_call.1} parent=1 // pred_check_branch
      %67 = sbr.rel (0) target = $region53
    $region52: #{tpu_custom_call.1} parent=1 // pred_region
      %69 = dma.done [#allocation3], 1024
    $region53: #{tpu_custom_call.1} parent=1 // pred_fallthru
      _
    // Predicated region
    $region54: #{tpu_custom_call.1} parent=1 // pred_check
      _
    $region55: #{tpu_custom_call.1} parent=1 // pred_check_branch
      %71 = sbr.rel (0) target = $region57
    $region56: #{tpu_custom_call.1} parent=1 // pred_region
      %73 = dma.done [#allocation6], 1024
    $region57: #{tpu_custom_call.1} parent=1 // pred_fallthru
      _
    %v75 = vld [vmem:[%s0] sm:$0xf]
    %v76 = vld [vmem:[%s0 + $0x4] sm:$0xf]
    %v77 = vld [vmem:[%s0 + $0x8] sm:$0xf]
    %v78 = vld [vmem:[%s0 + $0xc] sm:$0xf]
    %v79 = vld [vmem:[%s0 + $0x10] sm:$0xf]
    %v80 = vld [vmem:[%s0 + $0x14] sm:$0xf]
    %v81 = vld [vmem:[%s0 + $0x18] sm:$0xf]
    %v82 = vld [vmem:[%s0 + $0x1c] sm:$0xf]
    %v83 = vld [vmem:[%s0 + $0x20] sm:$0xf]
    %v84 = vld [vmem:[%s0 + $0x24] sm:$0xf]
    %v85 = vld [vmem:[%s0 + $0x28] sm:$0xf]
    %v86 = vld [vmem:[%s0 + $0x2c] sm:$0xf]
    %v87 = vld [vmem:[%s0 + $0x30] sm:$0xf]
    %v88 = vld [vmem:[%s0 + $0x34] sm:$0xf]
    %v89 = vld [vmem:[%s0 + $0x38] sm:$0xf]
    %v90 = vld [vmem:[%s0 + $0x3c] sm:$0xf]
    %v91 = vld [vmem:[%s0 + $0x40] sm:$0xf]
    %v92 = vld [vmem:[%s0 + $0x44] sm:$0xf]
    %v93 = vld [vmem:[%s0 + $0x48] sm:$0xf]
    %v94 = vld [vmem:[%s0 + $0x4c] sm:$0xf]
    %v95 = vld [vmem:[%s0 + $0x50] sm:$0xf]
    %v96 = vld [vmem:[%s0 + $0x54] sm:$0xf]
    %v97 = vld [vmem:[%s0 + $0x58] sm:$0xf]
    %v98 = vld [vmem:[%s0 + $0x5c] sm:$0xf]
    %v99 = vld [vmem:[%s0 + $0x60] sm:$0xf]
    %v100 = vld [vmem:[%s0 + $0x64] sm:$0xf]
    %v101 = vld [vmem:[%s0 + $0x68] sm:$0xf]
    %v102 = vld [vmem:[%s0 + $0x6c] sm:$0xf]
    %v103 = vld [vmem:[%s0 + $0x70] sm:$0xf]
    %v104 = vld [vmem:[%s0 + $0x74] sm:$0xf]
    %v105 = vld [vmem:[%s0 + $0x78] sm:$0xf]
    %v106 = vld [vmem:[%s0 + $0x7c] sm:$0xf]
    %v107 = vld [vmem:[#allocation2] sm:$0xff]
    %v108 = vld [vmem:[#allocation2 + $0x8] sm:$0xff]
    %v109 = vld [vmem:[#allocation2 + $0x10] sm:$0xff]
    %v110 = vld [vmem:[#allocation2 + $0x18] sm:$0xff]
    %v111 = vld [vmem:[#allocation2 + $0x20] sm:$0xff]
    %v112 = vld [vmem:[#allocation2 + $0x28] sm:$0xff]
    %v113 = vld [vmem:[#allocation2 + $0x30] sm:$0xff]
    %v114 = vld [vmem:[#allocation2 + $0x38] sm:$0xff]
    %v147 = vunpack.c.l.b16 %v75
    %v148 = vunpack.c.l.b16 %v76
    %v149 = vunpack.c.l.b16 %v77
    %v150 = vunpack.c.l.b16 %v78
    %v151 = vunpack.c.l.b16 %v79
    %v152 = vunpack.c.l.b16 %v80
    %v153 = vunpack.c.l.b16 %v81
    %v154 = vunpack.c.l.b16 %v82
    %v155 = vunpack.c.l.b16 %v83
    %v156 = vunpack.c.l.b16 %v84
    %v157 = vunpack.c.l.b16 %v85
    %v158 = vunpack.c.l.b16 %v86
    %v159 = vunpack.c.l.b16 %v87
    %v160 = vunpack.c.l.b16 %v88
    %v161 = vunpack.c.l.b16 %v89
    %v162 = vunpack.c.l.b16 %v90
    %v163 = vunpack.c.l.b16 %v91
    %v164 = vunpack.c.l.b16 %v92
    %v165 = vunpack.c.l.b16 %v93
    %v166 = vunpack.c.l.b16 %v94
    %v167 = vunpack.c.l.b16 %v95
    %v168 = vunpack.c.l.b16 %v96
    %v169 = vunpack.c.l.b16 %v97
    %v170 = vunpack.c.l.b16 %v98
    %v171 = vunpack.c.l.b16 %v99
    %v172 = vunpack.c.l.b16 %v100
    %v173 = vunpack.c.l.b16 %v101
    %v174 = vunpack.c.l.b16 %v102
    %v175 = vunpack.c.l.b16 %v103
    %v176 = vunpack.c.l.b16 %v104
    %v177 = vunpack.c.l.b16 %v105
    %v178 = vunpack.c.l.b16 %v106
    %v179 = vpack.c.b16 %v148, %v147
    %v180 = vpack.c.b16 %v150, %v149
    %v181 = vpack.c.b16 %v152, %v151
    %v182 = vpack.c.b16 %v154, %v153
    %v183 = vpack.c.b16 %v156, %v155
    %v184 = vpack.c.b16 %v158, %v157
    %v185 = vpack.c.b16 %v160, %v159
    %v186 = vpack.c.b16 %v162, %v161
    %v187 = vpack.c.b16 %v164, %v163
    %v188 = vpack.c.b16 %v166, %v165
    %v189 = vpack.c.b16 %v168, %v167
    %v190 = vpack.c.b16 %v170, %v169
    %v191 = vpack.c.b16 %v172, %v171
    %v192 = vpack.c.b16 %v174, %v173
    %v193 = vpack.c.b16 %v176, %v175
    %v194 = vpack.c.b16 %v178, %v177
    %v203 = vunpack.c.l.b16 %v107
    %v204 = vunpack.c.h.b16 %v107
    %v205 = vunpack.c.l.b16 %v108
    %v206 = vunpack.c.h.b16 %v108
    %v207 = vunpack.c.l.b16 %v109
    %v208 = vunpack.c.h.b16 %v109
    %v209 = vunpack.c.l.b16 %v110
    %v210 = vunpack.c.h.b16 %v110
    %v211 = vunpack.c.l.b16 %v111
    %v212 = vunpack.c.h.b16 %v111
    %v213 = vunpack.c.l.b16 %v112
    %v214 = vunpack.c.h.b16 %v112
    %v215 = vunpack.c.l.b16 %v113
    %v216 = vunpack.c.h.b16 %v113
    %v217 = vunpack.c.l.b16 %v114
    %v218 = vunpack.c.h.b16 %v114
    %v219 = vpack.c.b16 %v205, %v203
    %v220 = vpack.c.b16 %v206, %v204
    %v221 = vpack.c.b16 %v209, %v207
    %v222 = vpack.c.b16 %v210, %v208
    %v223 = vpack.c.b16 %v213, %v211
    %v224 = vpack.c.b16 %v214, %v212
    %v225 = vpack.c.b16 %v217, %v215
    %v226 = vpack.c.b16 %v218, %v216
    %vm235 = vcmask 523264
    %v237 = vsel %vm235, %v179, 0
    %v240 = vsel %vm235, %v180, 0
    %v243 = vsel %vm235, %v181, 0
    %v246 = vsel %vm235, %v182, 0
    %v249 = vsel %vm235, %v183, 0
    %v252 = vsel %vm235, %v184, 0
    %v255 = vsel %vm235, %v185, 0
    %v258 = vsel %vm235, %v186, 0
    %v261 = vsel %vm235, %v187, 0
    %v264 = vsel %vm235, %v188, 0
    %v267 = vsel %vm235, %v189, 0
    %v270 = vsel %vm235, %v190, 0
    %v273 = vsel %vm235, %v191, 0
    %v276 = vsel %vm235, %v192, 0
    %v279 = vsel %vm235, %v193, 0
    %v282 = vsel %vm235, %v194, 0
    %284 = vmatpush.bf16.msra.mxu0 0
    %285 = vmatpush.bf16.msra.mxu0 0
    %286 = vmatpush.bf16.msra.mxu0 0
    %287 = vmatpush.bf16.msra.mxu0 0
    %288 = vmatpush.bf16.msra.mxu0 %v225
    %289 = vmatpush.bf16.msra.mxu0 %v223
    %290 = vmatpush.bf16.msra.mxu0 %v221
    %291 = vmatpush.bf16.msra.mxu0 %v219
    %292 = vmatmul.bf16.gmra.mxu0 %v237
    %v293 = vpop.f32.mrf.mxu0
    %v294 = vadd.f32 0.0, %v293
    %v295 = vpop.f32.mrf.mxu0
    %v296 = vadd.f32 0.0, %v295
    %297 = vmatmul.bf16.gmra.mxu0 %v240
    %v298 = vpop.f32.mrf.mxu0
    %v299 = vadd.f32 0.0, %v298
    %v300 = vpop.f32.mrf.mxu0
    %v301 = vadd.f32 0.0, %v300
    %302 = vmatmul.bf16.gmra.mxu0 %v243
    %v303 = vpop.f32.mrf.mxu0
    %v304 = vadd.f32 0.0, %v303
    %v305 = vpop.f32.mrf.mxu0
    %v306 = vadd.f32 0.0, %v305
    %307 = vmatmul.bf16.gmra.mxu0 %v246
    %v308 = vpop.f32.mrf.mxu0
    %v309 = vadd.f32 0.0, %v308
    %v310 = vpop.f32.mrf.mxu0
    %v311 = vadd.f32 0.0, %v310
    %312 = vmatmul.bf16.gmra.mxu0 %v249
    %v313 = vpop.f32.mrf.mxu0
    %v314 = vadd.f32 0.0, %v313
    %v315 = vpop.f32.mrf.mxu0
    %v316 = vadd.f32 0.0, %v315
    %317 = vmatmul.bf16.gmra.mxu0 %v252
    %v318 = vpop.f32.mrf.mxu0
    %v319 = vadd.f32 0.0, %v318
    %v320 = vpop.f32.mrf.mxu0
    %v321 = vadd.f32 0.0, %v320
    %322 = vmatmul.bf16.gmra.mxu0 %v255
    %v323 = vpop.f32.mrf.mxu0
    %v324 = vadd.f32 0.0, %v323
    %v325 = vpop.f32.mrf.mxu0
    %v326 = vadd.f32 0.0, %v325
    %327 = vmatmul.bf16.gmra.mxu0 %v258
    %v328 = vpop.f32.mrf.mxu0
    %v329 = vadd.f32 0.0, %v328
    %v330 = vpop.f32.mrf.mxu0
    %v331 = vadd.f32 0.0, %v330
    %332 = vmatmul.bf16.gmra.mxu0 %v261
    %v333 = vpop.f32.mrf.mxu0
    %v334 = vadd.f32 0.0, %v333
    %v335 = vpop.f32.mrf.mxu0
    %v336 = vadd.f32 0.0, %v335
    %337 = vmatmul.bf16.gmra.mxu0 %v264
    %v338 = vpop.f32.mrf.mxu0
    %v339 = vadd.f32 0.0, %v338
    %v340 = vpop.f32.mrf.mxu0
    %v341 = vadd.f32 0.0, %v340
    %342 = vmatmul.bf16.gmra.mxu0 %v267
    %v343 = vpop.f32.mrf.mxu0
    %v344 = vadd.f32 0.0, %v343
    %v345 = vpop.f32.mrf.mxu0
    %v346 = vadd.f32 0.0, %v345
    %347 = vmatmul.bf16.gmra.mxu0 %v270
    %v348 = vpop.f32.mrf.mxu0
    %v349 = vadd.f32 0.0, %v348
    %v350 = vpop.f32.mrf.mxu0
    %v351 = vadd.f32 0.0, %v350
    %352 = vmatmul.bf16.gmra.mxu0 %v273
    %v353 = vpop.f32.mrf.mxu0
    %v354 = vadd.f32 0.0, %v353
    %v355 = vpop.f32.mrf.mxu0
    %v356 = vadd.f32 0.0, %v355
    %357 = vmatmul.bf16.gmra.mxu0 %v276
    %v358 = vpop.f32.mrf.mxu0
    %v359 = vadd.f32 0.0, %v358
    %v360 = vpop.f32.mrf.mxu0
    %v361 = vadd.f32 0.0, %v360
    %362 = vmatmul.bf16.gmra.mxu0 %v279
    %v363 = vpop.f32.mrf.mxu0
    %v364 = vadd.f32 0.0, %v363
    %v365 = vpop.f32.mrf.mxu0
    %v366 = vadd.f32 0.0, %v365
    %367 = vmatmul.bf16.gmra.mxu0 %v282
    %v368 = vpop.f32.mrf.mxu0
    %v369 = vadd.f32 0.0, %v368
    %v370 = vpop.f32.mrf.mxu0
    %v371 = vadd.f32 0.0, %v370
    %372 = vdwg.mxu0
    %373 = vmatpush.bf16.msra.mxu0 0
    %374 = vmatpush.bf16.msra.mxu0 0
    %375 = vmatpush.bf16.msra.mxu0 0
    %376 = vmatpush.bf16.msra.mxu0 0
    %377 = vmatpush.bf16.msra.mxu0 %v226
    %378 = vmatpush.bf16.msra.mxu0 %v224
    %379 = vmatpush.bf16.msra.mxu0 %v222
    %380 = vmatpush.bf16.msra.mxu0 %v220
    %381 = vmatmul.bf16.gmra.mxu0 %v237
    %v382 = vpop.f32.mrf.mxu0
    %v383 = vadd.f32 0.0, %v382
    %v384 = vpop.f32.mrf.mxu0
    %v385 = vadd.f32 0.0, %v384
    %386 = vmatmul.bf16.gmra.mxu0 %v240
    %v387 = vpop.f32.mrf.mxu0
    %v388 = vadd.f32 0.0, %v387
    %v389 = vpop.f32.mrf.mxu0
    %v390 = vadd.f32 0.0, %v389
    %391 = vmatmul.bf16.gmra.mxu0 %v243
    %v392 = vpop.f32.mrf.mxu0
    %v393 = vadd.f32 0.0, %v392
    %v394 = vpop.f32.mrf.mxu0
    %v395 = vadd.f32 0.0, %v394
    %396 = vmatmul.bf16.gmra.mxu0 %v246
    %v397 = vpop.f32.mrf.mxu0
    %v398 = vadd.f32 0.0, %v397
    %v399 = vpop.f32.mrf.mxu0
    %v400 = vadd.f32 0.0, %v399
    %401 = vmatmul.bf16.gmra.mxu0 %v249
    %v402 = vpop.f32.mrf.mxu0
    %v403 = vadd.f32 0.0, %v402
    %v404 = vpop.f32.mrf.mxu0
    %v405 = vadd.f32 0.0, %v404
    %406 = vmatmul.bf16.gmra.mxu0 %v252
    %v407 = vpop.f32.mrf.mxu0
    %v408 = vadd.f32 0.0, %v407
    %v409 = vpop.f32.mrf.mxu0
    %v410 = vadd.f32 0.0, %v409
    %411 = vmatmul.bf16.gmra.mxu0 %v255
    %v412 = vpop.f32.mrf.mxu0
    %v413 = vadd.f32 0.0, %v412
    %v414 = vpop.f32.mrf.mxu0
    %v415 = vadd.f32 0.0, %v414
    %416 = vmatmul.bf16.gmra.mxu0 %v258
    %v417 = vpop.f32.mrf.mxu0
    %v418 = vadd.f32 0.0, %v417
    %v419 = vpop.f32.mrf.mxu0
    %v420 = vadd.f32 0.0, %v419
    %421 = vmatmul.bf16.gmra.mxu0 %v261
    %v422 = vpop.f32.mrf.mxu0
    %v423 = vadd.f32 0.0, %v422
    %v424 = vpop.f32.mrf.mxu0
    %v425 = vadd.f32 0.0, %v424
    %426 = vmatmul.bf16.gmra.mxu0 %v264
    %v427 = vpop.f32.mrf.mxu0
    %v428 = vadd.f32 0.0, %v427
    %v429 = vpop.f32.mrf.mxu0
    %v430 = vadd.f32 0.0, %v429
    %431 = vmatmul.bf16.gmra.mxu0 %v267
    %v432 = vpop.f32.mrf.mxu0
    %v433 = vadd.f32 0.0, %v432
    %v434 = vpop.f32.mrf.mxu0
    %v435 = vadd.f32 0.0, %v434
    %436 = vmatmul.bf16.gmra.mxu0 %v270
    %v437 = vpop.f32.mrf.mxu0
    %v438 = vadd.f32 0.0, %v437
    %v439 = vpop.f32.mrf.mxu0
    %v440 = vadd.f32 0.0, %v439
    %441 = vmatmul.bf16.gmra.mxu0 %v273
    %v442 = vpop.f32.mrf.mxu0
    %v443 = vadd.f32 0.0, %v442
    %v444 = vpop.f32.mrf.mxu0
    %v445 = vadd.f32 0.0, %v444
    %446 = vmatmul.bf16.gmra.mxu0 %v276
    %v447 = vpop.f32.mrf.mxu0
    %v448 = vadd.f32 0.0, %v447
    %v449 = vpop.f32.mrf.mxu0
    %v450 = vadd.f32 0.0, %v449
    %451 = vmatmul.bf16.gmra.mxu0 %v279
    %v452 = vpop.f32.mrf.mxu0
    %v453 = vadd.f32 0.0, %v452
    %v454 = vpop.f32.mrf.mxu0
    %v455 = vadd.f32 0.0, %v454
    %456 = vmatmul.bf16.gmra.mxu0 %v282
    %v457 = vpop.f32.mrf.mxu0
    %v458 = vadd.f32 0.0, %v457
    %v459 = vpop.f32.mrf.mxu0
    %v460 = vadd.f32 0.0, %v459
    %461 = vdwg.mxu0
    %v462 = vld [vmem:[%s2] sm:$0x1]
    %v463 = vld [vmem:[%s3] sm:$0x1]
    %v464 = vadd.f32 %v294, %v296
    %v465 = vadd.f32 %v464, %v299
    %v466 = vadd.f32 %v465, %v301
    %v467 = vadd.f32 %v466, %v304
    %v468 = vadd.f32 %v467, %v306
    %v469 = vadd.f32 %v468, %v309
    %v470 = vadd.f32 %v469, %v311
    %v471 = vadd.f32 %v470, %v314
    %v472 = vadd.f32 %v471, %v316
    %v473 = vadd.f32 %v472, %v319
    %v474 = vadd.f32 %v473, %v321
    %v475 = vadd.f32 %v474, %v324
    %v476 = vadd.f32 %v475, %v326
    %v477 = vadd.f32 %v476, %v329
    %v478 = vadd.f32 %v477, %v331
    %v479 = vadd.f32 %v478, %v334
    %v480 = vadd.f32 %v479, %v336
    %v481 = vadd.f32 %v480, %v339
    %v482 = vadd.f32 %v481, %v341
    %v483 = vadd.f32 %v482, %v344
    %v484 = vadd.f32 %v483, %v346
    %v485 = vadd.f32 %v484, %v349
    %v486 = vadd.f32 %v485, %v351
    %v487 = vadd.f32 %v486, %v354
    %v488 = vadd.f32 %v487, %v356
    %v489 = vadd.f32 %v488, %v359
    %v490 = vadd.f32 %v489, %v361
    %v491 = vadd.f32 %v490, %v364
    %v492 = vadd.f32 %v491, %v366
    %v493 = vadd.f32 %v492, %v369
    %v494 = vadd.f32 %v493, %v371
    %v495 = vrot.slane %v494, 4
    %v496 = vadd.f32 %v494, %v495
    %v497 = vrot.slane %v496, 2
    %v498 = vadd.f32 %v496, %v497
    %v499 = vrot.slane %v498, 1
    %v500 = vadd.f32 %v498, %v499
    %v501 = vmul.f32 %v294, %v294
    %v502 = vmul.f32 %v296, %v296
    %v503 = vmul.f32 %v299, %v299
    %v504 = vmul.f32 %v301, %v301
    %v505 = vmul.f32 %v304, %v304
    %v506 = vmul.f32 %v306, %v306
    %v507 = vmul.f32 %v309, %v309
    %v508 = vmul.f32 %v311, %v311
    %v509 = vmul.f32 %v314, %v314
    %v510 = vmul.f32 %v316, %v316
    %v511 = vmul.f32 %v319, %v319
    %v512 = vmul.f32 %v321, %v321
    %v513 = vmul.f32 %v324, %v324
    %v514 = vmul.f32 %v326, %v326
    %v515 = vmul.f32 %v329, %v329
    %v516 = vmul.f32 %v331, %v331
    %v517 = vmul.f32 %v334, %v334
    %v518 = vmul.f32 %v336, %v336
    %v519 = vmul.f32 %v339, %v339
    %v520 = vmul.f32 %v341, %v341
    %v521 = vmul.f32 %v344, %v344
    %v522 = vmul.f32 %v346, %v346
    %v523 = vmul.f32 %v349, %v349
    %v524 = vmul.f32 %v351, %v351
    %v525 = vmul.f32 %v354, %v354
    %v526 = vmul.f32 %v356, %v356
    %v527 = vmul.f32 %v359, %v359
    %v528 = vmul.f32 %v361, %v361
    %v529 = vmul.f32 %v364, %v364
    %v530 = vmul.f32 %v366, %v366
    %v531 = vmul.f32 %v369, %v369
    %v532 = vmul.f32 %v371, %v371
    %v533 = vadd.f32 %v501, %v502
    %v534 = vadd.f32 %v533, %v503
    %v535 = vadd.f32 %v534, %v504
    %v536 = vadd.f32 %v535, %v505
    %v537 = vadd.f32 %v536, %v506
    %v538 = vadd.f32 %v537, %v507
    %v539 = vadd.f32 %v538, %v508
    %v540 = vadd.f32 %v539, %v509
    %v541 = vadd.f32 %v540, %v510
    %v542 = vadd.f32 %v541, %v511
    %v543 = vadd.f32 %v542, %v512
    %v544 = vadd.f32 %v543, %v513
    %v545 = vadd.f32 %v544, %v514
    %v546 = vadd.f32 %v545, %v515
    %v547 = vadd.f32 %v546, %v516
    %v548 = vadd.f32 %v547, %v517
    %v549 = vadd.f32 %v548, %v518
    %v550 = vadd.f32 %v549, %v519
    %v551 = vadd.f32 %v550, %v520
    %v552 = vadd.f32 %v551, %v521
    %v553 = vadd.f32 %v552, %v522
    %v554 = vadd.f32 %v553, %v523
    %v555 = vadd.f32 %v554, %v524
    %v556 = vadd.f32 %v555, %v525
    %v557 = vadd.f32 %v556, %v526
    %v558 = vadd.f32 %v557, %v527
    %v559 = vadd.f32 %v558, %v528
    %v560 = vadd.f32 %v559, %v529
    %v561 = vadd.f32 %v560, %v530
    %v562 = vadd.f32 %v561, %v531
    %v563 = vadd.f32 %v562, %v532
    %v564 = vrot.slane %v563, 4
    %v565 = vadd.f32 %v563, %v564
    %v566 = vrot.slane %v565, 2
    %v567 = vadd.f32 %v565, %v566
    %v568 = vrot.slane %v567, 1
    %v569 = vadd.f32 %v567, %v568
    %v570 = vmul.f32 %v500, 0.00390625
    %v571 = vmul.f32 %v569, 0.00390625
    %v572 = vmul.f32 %v570, %v570
    %v573 = vsub.f32 %v571, %v572
    %v574 = vmax.f32 %v573, 0.0
    %v575 = vadd.f32 %v574, 1e-05
    %v576 = vrsqrt.pop %v575
    %v577 = vmul.f32 %v576, %v575
    %v578 = vmul.f32 %v577, %v576
    %v579 = vmul.f32 0.5, %v578
    %v580 = vsub.f32 1.5, %v579
    %v581 = vmul.f32 %v576, %v580
    %vm582 = vweird.f32 %v575
    %vm583 = vweird.f32 %v576
    %vm584 = vmor %vm582, %vm583
    %v585 = vsel %vm584, %v576, %v581
    %v586 = vmul.f32 %v462, %v585
    %v587 = vmul.f32 %v570, %v586
    %v588 = vsub.f32 %v463, %v587
    %v590 = vperm.slane %v586, 0
    %v592 = vmul.f32 %v294, %v590
    %v593 = vmul.f32 %v296, %v590
    %v594 = vmul.f32 %v299, %v590
    %v595 = vmul.f32 %v301, %v590
    %v596 = vmul.f32 %v304, %v590
    %v597 = vmul.f32 %v306, %v590
    %v598 = vmul.f32 %v309, %v590
    %v599 = vmul.f32 %v311, %v590
    %v600 = vmul.f32 %v314, %v590
    %v601 = vmul.f32 %v316, %v590
    %v602 = vmul.f32 %v319, %v590
    %v603 = vmul.f32 %v321, %v590
    %v604 = vmul.f32 %v324, %v590
    %v605 = vmul.f32 %v326, %v590
    %v606 = vmul.f32 %v329, %v590
    %v607 = vmul.f32 %v331, %v590
    %v608 = vmul.f32 %v334, %v590
    %v609 = vmul.f32 %v336, %v590
    %v610 = vmul.f32 %v339, %v590
    %v611 = vmul.f32 %v341, %v590
    %v612 = vmul.f32 %v344, %v590
    %v613 = vmul.f32 %v346, %v590
    %v614 = vmul.f32 %v349, %v590
    %v615 = vmul.f32 %v351, %v590
    %v616 = vmul.f32 %v354, %v590
    %v617 = vmul.f32 %v356, %v590
    %v618 = vmul.f32 %v359, %v590
    %v619 = vmul.f32 %v361, %v590
    %v620 = vmul.f32 %v364, %v590
    %v621 = vmul.f32 %v366, %v590
    %v622 = vmul.f32 %v369, %v590
    %v623 = vmul.f32 %v371, %v590
    %v625 = vperm.slane %v588, 0
    %v627 = vadd.f32 %v592, %v625
    %v628 = vadd.f32 %v593, %v625
    %v629 = vadd.f32 %v594, %v625
    %v630 = vadd.f32 %v595, %v625
    %v631 = vadd.f32 %v596, %v625
    %v632 = vadd.f32 %v597, %v625
    %v633 = vadd.f32 %v598, %v625
    %v634 = vadd.f32 %v599, %v625
    %v635 = vadd.f32 %v600, %v625
    %v636 = vadd.f32 %v601, %v625
    %v637 = vadd.f32 %v602, %v625
    %v638 = vadd.f32 %v603, %v625
    %v639 = vadd.f32 %v604, %v625
    %v640 = vadd.f32 %v605, %v625
    %v641 = vadd.f32 %v606, %v625
    %v642 = vadd.f32 %v607, %v625
    %v643 = vadd.f32 %v608, %v625
    %v644 = vadd.f32 %v609, %v625
    %v645 = vadd.f32 %v610, %v625
    %v646 = vadd.f32 %v611, %v625
    %v647 = vadd.f32 %v612, %v625
    %v648 = vadd.f32 %v613, %v625
    %v649 = vadd.f32 %v614, %v625
    %v650 = vadd.f32 %v615, %v625
    %v651 = vadd.f32 %v616, %v625
    %v652 = vadd.f32 %v617, %v625
    %v653 = vadd.f32 %v618, %v625
    %v654 = vadd.f32 %v619, %v625
    %v655 = vadd.f32 %v620, %v625
    %v656 = vadd.f32 %v621, %v625
    %v657 = vadd.f32 %v622, %v625
    %v658 = vadd.f32 %v623, %v625
    %v659 = vmax.f32 %v627, 0.0
    %v660 = vmax.f32 %v628, 0.0
    %v661 = vmax.f32 %v629, 0.0
    %v662 = vmax.f32 %v630, 0.0
    %v663 = vmax.f32 %v631, 0.0
    %v664 = vmax.f32 %v632, 0.0
    %v665 = vmax.f32 %v633, 0.0
    %v666 = vmax.f32 %v634, 0.0
    %v667 = vmax.f32 %v635, 0.0
    %v668 = vmax.f32 %v636, 0.0
    %v669 = vmax.f32 %v637, 0.0
    %v670 = vmax.f32 %v638, 0.0
    %v671 = vmax.f32 %v639, 0.0
    %v672 = vmax.f32 %v640, 0.0
    %v673 = vmax.f32 %v641, 0.0
    %v674 = vmax.f32 %v642, 0.0
    %v675 = vmax.f32 %v643, 0.0
    %v676 = vmax.f32 %v644, 0.0
    %v677 = vmax.f32 %v645, 0.0
    %v678 = vmax.f32 %v646, 0.0
    %v679 = vmax.f32 %v647, 0.0
    %v680 = vmax.f32 %v648, 0.0
    %v681 = vmax.f32 %v649, 0.0
    %v682 = vmax.f32 %v650, 0.0
    %v683 = vmax.f32 %v651, 0.0
    %v684 = vmax.f32 %v652, 0.0
    %v685 = vmax.f32 %v653, 0.0
    %v686 = vmax.f32 %v654, 0.0
    %v687 = vmax.f32 %v655, 0.0
    %v688 = vmax.f32 %v656, 0.0
    %v689 = vmax.f32 %v657, 0.0
    %v690 = vmax.f32 %v658, 0.0
    %v691 = vlaneseq
    %v692 = vshrl.u32 %v691, 7
    %v693 = vadd.s32 %v692, 8
    %v694 = vadd.s32 %v692, 16
    %v695 = vadd.s32 %v692, 24
    %v696 = vadd.s32 %v692, 32
    %v697 = vadd.s32 %v692, 40
    %v698 = vadd.s32 %v692, 48
    %v699 = vadd.s32 %v692, 56
    %v700 = vadd.s32 %v692, 64
    %v701 = vadd.s32 %v692, 72
    %v702 = vadd.s32 %v692, 80
    %v703 = vadd.s32 %v692, 88
    %v704 = vadd.s32 %v692, 96
    %v705 = vadd.s32 %v692, 104
    %v706 = vadd.s32 %v692, 112
    %v707 = vadd.s32 %v692, 120
    %vm708 = vcmp.eq.s32.totalorder %v692, 0
    %vm709 = vcmp.eq.s32.totalorder %v693, 0
    %vm710 = vcmp.eq.s32.totalorder %v694, 0
    %vm711 = vcmp.eq.s32.totalorder %v695, 0
    %vm712 = vcmp.eq.s32.totalorder %v696, 0
    %vm713 = vcmp.eq.s32.totalorder %v697, 0
    %vm714 = vcmp.eq.s32.totalorder %v698, 0
    %vm715 = vcmp.eq.s32.totalorder %v699, 0
    %vm716 = vcmp.eq.s32.totalorder %v700, 0
    %vm717 = vcmp.eq.s32.totalorder %v701, 0
    %vm718 = vcmp.eq.s32.totalorder %v702, 0
    %vm719 = vcmp.eq.s32.totalorder %v703, 0
    %vm720 = vcmp.eq.s32.totalorder %v704, 0
    %vm721 = vcmp.eq.s32.totalorder %v705, 0
    %vm722 = vcmp.eq.s32.totalorder %v706, 0
    %vm723 = vcmp.eq.s32.totalorder %v707, 0
    %v724 = vrot.slane %v659, 7
    %v725 = vrot.slane %v660, 7
    %v726 = vrot.slane %v661, 7
    %v727 = vrot.slane %v662, 7
    %v728 = vrot.slane %v663, 7
    %v729 = vrot.slane %v664, 7
    %v730 = vrot.slane %v665, 7
    %v731 = vrot.slane %v666, 7
    %v732 = vrot.slane %v667, 7
    %v733 = vrot.slane %v668, 7
    %v734 = vrot.slane %v669, 7
    %v735 = vrot.slane %v670, 7
    %v736 = vrot.slane %v671, 7
    %v737 = vrot.slane %v672, 7
    %v738 = vrot.slane %v673, 7
    %v739 = vrot.slane %v674, 7
    %v740 = vrot.slane %v675, 7
    %v741 = vrot.slane %v676, 7
    %v742 = vrot.slane %v677, 7
    %v743 = vrot.slane %v678, 7
    %v744 = vrot.slane %v679, 7
    %v745 = vrot.slane %v680, 7
    %v746 = vrot.slane %v681, 7
    %v747 = vrot.slane %v682, 7
    %v748 = vrot.slane %v683, 7
    %v749 = vrot.slane %v684, 7
    %v750 = vrot.slane %v685, 7
    %v751 = vrot.slane %v686, 7
    %v752 = vrot.slane %v687, 7
    %v753 = vrot.slane %v688, 7
    %v754 = vrot.slane %v689, 7
    %v755 = vrot.slane %v690, 7
    %vm756 = vcmp.lt.s32.totalorder %v692, 1
    %v757 = vsel %vm756, %v754, %v755
    %v758 = vsel %vm756, %v753, %v754
    %v759 = vsel %vm756, %v752, %v753
    %v760 = vsel %vm756, %v751, %v752
    %v761 = vsel %vm756, %v750, %v751
    %v762 = vsel %vm756, %v749, %v750
    %v763 = vsel %vm756, %v748, %v749
    %v764 = vsel %vm756, %v747, %v748
    %v765 = vsel %vm756, %v746, %v747
    %v766 = vsel %vm756, %v745, %v746
    %v767 = vsel %vm756, %v744, %v745
    %v768 = vsel %vm756, %v743, %v744
    %v769 = vsel %vm756, %v742, %v743
    %v770 = vsel %vm756, %v741, %v742
    %v771 = vsel %vm756, %v740, %v741
    %v772 = vsel %vm756, %v739, %v740
    %v773 = vsel %vm756, %v738, %v739
    %v774 = vsel %vm756, %v737, %v738
    %v775 = vsel %vm756, %v736, %v737
    %v776 = vsel %vm756, %v735, %v736
    %v777 = vsel %vm756, %v734, %v735
    %v778 = vsel %vm756, %v733, %v734
    %v779 = vsel %vm756, %v732, %v733
    %v780 = vsel %vm756, %v731, %v732
    %v781 = vsel %vm756, %v730, %v731
    %v782 = vsel %vm756, %v729, %v730
    %v783 = vsel %vm756, %v728, %v729
    %v784 = vsel %vm756, %v727, %v728
    %v785 = vsel %vm756, %v726, %v727
    %v786 = vsel %vm756, %v725, %v726
    %v787 = vsel %vm756, %v724, %v725
    %v788 = vsel %vm756, %v755, %v724
    %v789 = vsel %vm708, 1, 0
    %v790 = vsel %vm709, 1, 0
    %v791 = vsel %vm710, 1, 0
    %v792 = vsel %vm711, 1, 0
    %v793 = vsel %vm712, 1, 0
    %v794 = vsel %vm713, 1, 0
    %v795 = vsel %vm714, 1, 0
    %v796 = vsel %vm715, 1, 0
    %v797 = vsel %vm716, 1, 0
    %v798 = vsel %vm717, 1, 0
    %v799 = vsel %vm718, 1, 0
    %v800 = vsel %vm719, 1, 0
    %v801 = vsel %vm720, 1, 0
    %v802 = vsel %vm721, 1, 0
    %v803 = vsel %vm722, 1, 0
    %v804 = vsel %vm723, 1, 0
    %vm805 = vcmp.eq.s32.totalorder %v789, 1
    %vm806 = vcmp.eq.s32.totalorder %v790, 1
    %vm807 = vcmp.eq.s32.totalorder %v791, 1
    %vm808 = vcmp.eq.s32.totalorder %v792, 1
    %vm809 = vcmp.eq.s32.totalorder %v793, 1
    %vm810 = vcmp.eq.s32.totalorder %v794, 1
    %vm811 = vcmp.eq.s32.totalorder %v795, 1
    %vm812 = vcmp.eq.s32.totalorder %v796, 1
    %vm813 = vcmp.eq.s32.totalorder %v797, 1
    %vm814 = vcmp.eq.s32.totalorder %v798, 1
    %vm815 = vcmp.eq.s32.totalorder %v799, 1
    %vm816 = vcmp.eq.s32.totalorder %v800, 1
    %vm817 = vcmp.eq.s32.totalorder %v801, 1
    %vm818 = vcmp.eq.s32.totalorder %v802, 1
    %vm819 = vcmp.eq.s32.totalorder %v803, 1
    %vm820 = vcmp.eq.s32.totalorder %v804, 1
    %v821 = vsel %vm805, 0.0, %v788
    %v822 = vsel %vm806, 0.0, %v787
    %v823 = vsel %vm807, 0.0, %v786
    %v824 = vsel %vm808, 0.0, %v785
    %v825 = vsel %vm809, 0.0, %v784
    %v826 = vsel %vm810, 0.0, %v783
    %v827 = vsel %vm811, 0.0, %v782
    %v828 = vsel %vm812, 0.0, %v781
    %v829 = vsel %vm813, 0.0, %v780
    %v830 = vsel %vm814, 0.0, %v779
    %v831 = vsel %vm815, 0.0, %v778
    %v832 = vsel %vm816, 0.0, %v777
    %v833 = vsel %vm817, 0.0, %v776
    %v834 = vsel %vm818, 0.0, %v775
    %v835 = vsel %vm819, 0.0, %v774
    %v836 = vsel %vm820, 0.0, %v773
    %v837 = vsel %vm805, 0.0, %v772
    %v838 = vsel %vm806, 0.0, %v771
    %v839 = vsel %vm807, 0.0, %v770
    %v840 = vsel %vm808, 0.0, %v769
    %v841 = vsel %vm809, 0.0, %v768
    %v842 = vsel %vm810, 0.0, %v767
    %v843 = vsel %vm811, 0.0, %v766
    %v844 = vsel %vm812, 0.0, %v765
    %v845 = vsel %vm813, 0.0, %v764
    %v846 = vsel %vm814, 0.0, %v763
    %v847 = vsel %vm815, 0.0, %v762
    %v848 = vsel %vm816, 0.0, %v761
    %v849 = vsel %vm817, 0.0, %v760
    %v850 = vsel %vm818, 0.0, %v759
    %v851 = vsel %vm819, 0.0, %v758
    %v852 = vsel %vm820, 0.0, %v757
    %v853 = vpack.c.bf16 %v821, %v821
    %v854 = vpack.c.bf16 %v822, %v822
    %v855 = vpack.c.bf16 %v823, %v823
    %v856 = vpack.c.bf16 %v824, %v824
    %v857 = vpack.c.bf16 %v825, %v825
    %v858 = vpack.c.bf16 %v826, %v826
    %v859 = vpack.c.bf16 %v827, %v827
    %v860 = vpack.c.bf16 %v828, %v828
    %v861 = vpack.c.bf16 %v829, %v829
    %v862 = vpack.c.bf16 %v830, %v830
    %v863 = vpack.c.bf16 %v831, %v831
    %v864 = vpack.c.bf16 %v832, %v832
    %v865 = vpack.c.bf16 %v833, %v833
    %v866 = vpack.c.bf16 %v834, %v834
    %v867 = vpack.c.bf16 %v835, %v835
    %v868 = vpack.c.bf16 %v836, %v836
    %v869 = vpack.c.bf16 %v837, %v837
    %v870 = vpack.c.bf16 %v838, %v838
    %v871 = vpack.c.bf16 %v839, %v839
    %v872 = vpack.c.bf16 %v840, %v840
    %v873 = vpack.c.bf16 %v841, %v841
    %v874 = vpack.c.bf16 %v842, %v842
    %v875 = vpack.c.bf16 %v843, %v843
    %v876 = vpack.c.bf16 %v844, %v844
    %v877 = vpack.c.bf16 %v845, %v845
    %v878 = vpack.c.bf16 %v846, %v846
    %v879 = vpack.c.bf16 %v847, %v847
    %v880 = vpack.c.bf16 %v848, %v848
    %v881 = vpack.c.bf16 %v849, %v849
    %v882 = vpack.c.bf16 %v850, %v850
    %v883 = vpack.c.bf16 %v851, %v851
    %v884 = vpack.c.bf16 %v852, %v852
    %vm885 = vcmp.eq.s32.totalorder %v692, 127
    %vm886 = vcmp.eq.s32.totalorder %v693, 127
    %vm887 = vcmp.eq.s32.totalorder %v694, 127
    %vm888 = vcmp.eq.s32.totalorder %v695, 127
    %vm889 = vcmp.eq.s32.totalorder %v696, 127
    %vm890 = vcmp.eq.s32.totalorder %v697, 127
    %vm891 = vcmp.eq.s32.totalorder %v698, 127
    %vm892 = vcmp.eq.s32.totalorder %v699, 127
    %vm893 = vcmp.eq.s32.totalorder %v700, 127
    %vm894 = vcmp.eq.s32.totalorder %v701, 127
    %vm895 = vcmp.eq.s32.totalorder %v702, 127
    %vm896 = vcmp.eq.s32.totalorder %v703, 127
    %vm897 = vcmp.eq.s32.totalorder %v704, 127
    %vm898 = vcmp.eq.s32.totalorder %v705, 127
    %vm899 = vcmp.eq.s32.totalorder %v706, 127
    %vm900 = vcmp.eq.s32.totalorder %v707, 127
    %v901 = vrot.slane %v659, 1
    %v902 = vrot.slane %v660, 1
    %v903 = vrot.slane %v661, 1
    %v904 = vrot.slane %v662, 1
    %v905 = vrot.slane %v663, 1
    %v906 = vrot.slane %v664, 1
    %v907 = vrot.slane %v665, 1
    %v908 = vrot.slane %v666, 1
    %v909 = vrot.slane %v667, 1
    %v910 = vrot.slane %v668, 1
    %v911 = vrot.slane %v669, 1
    %v912 = vrot.slane %v670, 1
    %v913 = vrot.slane %v671, 1
    %v914 = vrot.slane %v672, 1
    %v915 = vrot.slane %v673, 1
    %v916 = vrot.slane %v674, 1
    %v917 = vrot.slane %v675, 1
    %v918 = vrot.slane %v676, 1
    %v919 = vrot.slane %v677, 1
    %v920 = vrot.slane %v678, 1
    %v921 = vrot.slane %v679, 1
    %v922 = vrot.slane %v680, 1
    %v923 = vrot.slane %v681, 1
    %v924 = vrot.slane %v682, 1
    %v925 = vrot.slane %v683, 1
    %v926 = vrot.slane %v684, 1
    %v927 = vrot.slane %v685, 1
    %v928 = vrot.slane %v686, 1
    %v929 = vrot.slane %v687, 1
    %v930 = vrot.slane %v688, 1
    %v931 = vrot.slane %v689, 1
    %v932 = vrot.slane %v690, 1
    %vm933 = vcmp.lt.s32.totalorder %v692, 7
    %v934 = vsel %vm933, %v931, %v932
    %v935 = vsel %vm933, %v930, %v931
    %v936 = vsel %vm933, %v929, %v930
    %v937 = vsel %vm933, %v928, %v929
    %v938 = vsel %vm933, %v927, %v928
    %v939 = vsel %vm933, %v926, %v927
    %v940 = vsel %vm933, %v925, %v926
    %v941 = vsel %vm933, %v924, %v925
    %v942 = vsel %vm933, %v923, %v924
    %v943 = vsel %vm933, %v922, %v923
    %v944 = vsel %vm933, %v921, %v922
    %v945 = vsel %vm933, %v920, %v921
    %v946 = vsel %vm933, %v919, %v920
    %v947 = vsel %vm933, %v918, %v919
    %v948 = vsel %vm933, %v917, %v918
    %v949 = vsel %vm933, %v916, %v917
    %v950 = vsel %vm933, %v915, %v916
    %v951 = vsel %vm933, %v914, %v915
    %v952 = vsel %vm933, %v913, %v914
    %v953 = vsel %vm933, %v912, %v913
    %v954 = vsel %vm933, %v911, %v912
    %v955 = vsel %vm933, %v910, %v911
    %v956 = vsel %vm933, %v909, %v910
    %v957 = vsel %vm933, %v908, %v909
    %v958 = vsel %vm933, %v907, %v908
    %v959 = vsel %vm933, %v906, %v907
    %v960 = vsel %vm933, %v905, %v906
    %v961 = vsel %vm933, %v904, %v905
    %v962 = vsel %vm933, %v903, %v904
    %v963 = vsel %vm933, %v902, %v903
    %v964 = vsel %vm933, %v901, %v902
    %v965 = vsel %vm933, %v932, %v901
    %v966 = vsel %vm885, 1, 0
    %v967 = vsel %vm886, 1, 0
    %v968 = vsel %vm887, 1, 0
    %v969 = vsel %vm888, 1, 0
    %v970 = vsel %vm889, 1, 0
    %v971 = vsel %vm890, 1, 0
    %v972 = vsel %vm891, 1, 0
    %v973 = vsel %vm892, 1, 0
    %v974 = vsel %vm893, 1, 0
    %v975 = vsel %vm894, 1, 0
    %v976 = vsel %vm895, 1, 0
    %v977 = vsel %vm896, 1, 0
    %v978 = vsel %vm897, 1, 0
    %v979 = vsel %vm898, 1, 0
    %v980 = vsel %vm899, 1, 0
    %v981 = vsel %vm900, 1, 0
    %vm982 = vcmp.eq.s32.totalorder %v966, 1
    %vm983 = vcmp.eq.s32.totalorder %v967, 1
    %vm984 = vcmp.eq.s32.totalorder %v968, 1
    %vm985 = vcmp.eq.s32.totalorder %v969, 1
    %vm986 = vcmp.eq.s32.totalorder %v970, 1
    %vm987 = vcmp.eq.s32.totalorder %v971, 1
    %vm988 = vcmp.eq.s32.totalorder %v972, 1
    %vm989 = vcmp.eq.s32.totalorder %v973, 1
    %vm990 = vcmp.eq.s32.totalorder %v974, 1
    %vm991 = vcmp.eq.s32.totalorder %v975, 1
    %vm992 = vcmp.eq.s32.totalorder %v976, 1
    %vm993 = vcmp.eq.s32.totalorder %v977, 1
    %vm994 = vcmp.eq.s32.totalorder %v978, 1
    %vm995 = vcmp.eq.s32.totalorder %v979, 1
    %vm996 = vcmp.eq.s32.totalorder %v980, 1
    %vm997 = vcmp.eq.s32.totalorder %v981, 1
    %v998 = vsel %vm982, 0.0, %v964
    %v999 = vsel %vm983, 0.0, %v963
    %v1000 = vsel %vm984, 0.0, %v962
    %v1001 = vsel %vm985, 0.0, %v961
    %v1002 = vsel %vm986, 0.0, %v960
    %v1003 = vsel %vm987, 0.0, %v959
    %v1004 = vsel %vm988, 0.0, %v958
    %v1005 = vsel %vm989, 0.0, %v957
    %v1006 = vsel %vm990, 0.0, %v956
    %v1007 = vsel %vm991, 0.0, %v955
    %v1008 = vsel %vm992, 0.0, %v954
    %v1009 = vsel %vm993, 0.0, %v953
    %v1010 = vsel %vm994, 0.0, %v952
    %v1011 = vsel %vm995, 0.0, %v951
    %v1012 = vsel %vm996, 0.0, %v950
    %v1013 = vsel %vm997, 0.0, %v949
    %v1014 = vsel %vm982, 0.0, %v948
    %v1015 = vsel %vm983, 0.0, %v947
    %v1016 = vsel %vm984, 0.0, %v946
    %v1017 = vsel %vm985, 0.0, %v945
    %v1018 = vsel %vm986, 0.0, %v944
    %v1019 = vsel %vm987, 0.0, %v943
    %v1020 = vsel %vm988, 0.0, %v942
    %v1021 = vsel %vm989, 0.0, %v941
    %v1022 = vsel %vm990, 0.0, %v940
    %v1023 = vsel %vm991, 0.0, %v939
    %v1024 = vsel %vm992, 0.0, %v938
    %v1025 = vsel %vm993, 0.0, %v937
    %v1026 = vsel %vm994, 0.0, %v936
    %v1027 = vsel %vm995, 0.0, %v935
    %v1028 = vsel %vm996, 0.0, %v934
    %v1029 = vsel %vm997, 0.0, %v965
    %v1030 = vpack.c.bf16 %v998, %v998
    %v1031 = vpack.c.bf16 %v999, %v999
    %v1032 = vpack.c.bf16 %v1000, %v1000
    %v1033 = vpack.c.bf16 %v1001, %v1001
    %v1034 = vpack.c.bf16 %v1002, %v1002
    %v1035 = vpack.c.bf16 %v1003, %v1003
    %v1036 = vpack.c.bf16 %v1004, %v1004
    %v1037 = vpack.c.bf16 %v1005, %v1005
    %v1038 = vpack.c.bf16 %v1006, %v1006
    %v1039 = vpack.c.bf16 %v1007, %v1007
    %v1040 = vpack.c.bf16 %v1008, %v1008
    %v1041 = vpack.c.bf16 %v1009, %v1009
    %v1042 = vpack.c.bf16 %v1010, %v1010
    %v1043 = vpack.c.bf16 %v1011, %v1011
    %v1044 = vpack.c.bf16 %v1012, %v1012
    %v1045 = vpack.c.bf16 %v1013, %v1013
    %v1046 = vpack.c.bf16 %v1014, %v1014
    %v1047 = vpack.c.bf16 %v1015, %v1015
    %v1048 = vpack.c.bf16 %v1016, %v1016
    %v1049 = vpack.c.bf16 %v1017, %v1017
    %v1050 = vpack.c.bf16 %v1018, %v1018
    %v1051 = vpack.c.bf16 %v1019, %v1019
    %v1052 = vpack.c.bf16 %v1020, %v1020
    %v1053 = vpack.c.bf16 %v1021, %v1021
    %v1054 = vpack.c.bf16 %v1022, %v1022
    %v1055 = vpack.c.bf16 %v1023, %v1023
    %v1056 = vpack.c.bf16 %v1024, %v1024
    %v1057 = vpack.c.bf16 %v1025, %v1025
    %v1058 = vpack.c.bf16 %v1026, %v1026
    %v1059 = vpack.c.bf16 %v1027, %v1027
    %v1060 = vpack.c.bf16 %v1028, %v1028
    %v1061 = vpack.c.bf16 %v1029, %v1029
    %v1062 = vpack.c.bf16 %v659, %v659
    %v1063 = vpack.c.bf16 %v660, %v660
    %v1064 = vpack.c.bf16 %v661, %v661
    %v1065 = vpack.c.bf16 %v662, %v662
    %v1066 = vpack.c.bf16 %v663, %v663
    %v1067 = vpack.c.bf16 %v664, %v664
    %v1068 = vpack.c.bf16 %v665, %v665
    %v1069 = vpack.c.bf16 %v666, %v666
    %v1070 = vpack.c.bf16 %v667, %v667
    %v1071 = vpack.c.bf16 %v668, %v668
    %v1072 = vpack.c.bf16 %v669, %v669
    %v1073 = vpack.c.bf16 %v670, %v670
    %v1074 = vpack.c.bf16 %v671, %v671
    %v1075 = vpack.c.bf16 %v672, %v672
    %v1076 = vpack.c.bf16 %v673, %v673
    %v1077 = vpack.c.bf16 %v674, %v674
    %v1078 = vpack.c.bf16 %v675, %v675
    %v1079 = vpack.c.bf16 %v676, %v676
    %v1080 = vpack.c.bf16 %v677, %v677
    %v1081 = vpack.c.bf16 %v678, %v678
    %v1082 = vpack.c.bf16 %v679, %v679
    %v1083 = vpack.c.bf16 %v680, %v680
    %v1084 = vpack.c.bf16 %v681, %v681
    %v1085 = vpack.c.bf16 %v682, %v682
    %v1086 = vpack.c.bf16 %v683, %v683
    %v1087 = vpack.c.bf16 %v684, %v684
    %v1088 = vpack.c.bf16 %v685, %v685
    %v1089 = vpack.c.bf16 %v686, %v686
    %v1090 = vpack.c.bf16 %v687, %v687
    %v1091 = vpack.c.bf16 %v688, %v688
    %v1092 = vpack.c.bf16 %v689, %v689
    %v1093 = vpack.c.bf16 %v690, %v690
    %v1126 = vunpack.c.l.b16 %v853
    %v1127 = vunpack.c.l.b16 %v854
    %v1128 = vunpack.c.l.b16 %v855
    %v1129 = vunpack.c.l.b16 %v856
    %v1130 = vunpack.c.l.b16 %v857
    %v1131 = vunpack.c.l.b16 %v858
    %v1132 = vunpack.c.l.b16 %v859
    %v1133 = vunpack.c.l.b16 %v860
    %v1134 = vunpack.c.l.b16 %v861
    %v1135 = vunpack.c.l.b16 %v862
    %v1136 = vunpack.c.l.b16 %v863
    %v1137 = vunpack.c.l.b16 %v864
    %v1138 = vunpack.c.l.b16 %v865
    %v1139 = vunpack.c.l.b16 %v866
    %v1140 = vunpack.c.l.b16 %v867
    %v1141 = vunpack.c.l.b16 %v868
    %v1142 = vunpack.c.l.b16 %v869
    %v1143 = vunpack.c.l.b16 %v870
    %v1144 = vunpack.c.l.b16 %v871
    %v1145 = vunpack.c.l.b16 %v872
    %v1146 = vunpack.c.l.b16 %v873
    %v1147 = vunpack.c.l.b16 %v874
    %v1148 = vunpack.c.l.b16 %v875
    %v1149 = vunpack.c.l.b16 %v876
    %v1150 = vunpack.c.l.b16 %v877
    %v1151 = vunpack.c.l.b16 %v878
    %v1152 = vunpack.c.l.b16 %v879
    %v1153 = vunpack.c.l.b16 %v880
    %v1154 = vunpack.c.l.b16 %v881
    %v1155 = vunpack.c.l.b16 %v882
    %v1156 = vunpack.c.l.b16 %v883
    %v1157 = vunpack.c.l.b16 %v884
    %v1158 = vpack.c.b16 %v1127, %v1126
    %v1159 = vpack.c.b16 %v1129, %v1128
    %v1160 = vpack.c.b16 %v1131, %v1130
    %v1161 = vpack.c.b16 %v1133, %v1132
    %v1162 = vpack.c.b16 %v1135, %v1134
    %v1163 = vpack.c.b16 %v1137, %v1136
    %v1164 = vpack.c.b16 %v1139, %v1138
    %v1165 = vpack.c.b16 %v1141, %v1140
    %v1166 = vpack.c.b16 %v1143, %v1142
    %v1167 = vpack.c.b16 %v1145, %v1144
    %v1168 = vpack.c.b16 %v1147, %v1146
    %v1169 = vpack.c.b16 %v1149, %v1148
    %v1170 = vpack.c.b16 %v1151, %v1150
    %v1171 = vpack.c.b16 %v1153, %v1152
    %v1172 = vpack.c.b16 %v1155, %v1154
    %v1173 = vpack.c.b16 %v1157, %v1156
    %v1222 = vunpack.c.l.b16 %v1062
    %v1223 = vunpack.c.l.b16 %v1063
    %v1224 = vunpack.c.l.b16 %v1064
    %v1225 = vunpack.c.l.b16 %v1065
    %v1226 = vunpack.c.l.b16 %v1066
    %v1227 = vunpack.c.l.b16 %v1067
    %v1228 = vunpack.c.l.b16 %v1068
    %v1229 = vunpack.c.l.b16 %v1069
    %v1230 = vunpack.c.l.b16 %v1070
    %v1231 = vunpack.c.l.b16 %v1071
    %v1232 = vunpack.c.l.b16 %v1072
    %v1233 = vunpack.c.l.b16 %v1073
    %v1234 = vunpack.c.l.b16 %v1074
    %v1235 = vunpack.c.l.b16 %v1075
    %v1236 = vunpack.c.l.b16 %v1076
    %v1237 = vunpack.c.l.b16 %v1077
    %v1238 = vunpack.c.l.b16 %v1078
    %v1239 = vunpack.c.l.b16 %v1079
    %v1240 = vunpack.c.l.b16 %v1080
    %v1241 = vunpack.c.l.b16 %v1081
    %v1242 = vunpack.c.l.b16 %v1082
    %v1243 = vunpack.c.l.b16 %v1083
    %v1244 = vunpack.c.l.b16 %v1084
    %v1245 = vunpack.c.l.b16 %v1085
    %v1246 = vunpack.c.l.b16 %v1086
    %v1247 = vunpack.c.l.b16 %v1087
    %v1248 = vunpack.c.l.b16 %v1088
    %v1249 = vunpack.c.l.b16 %v1089
    %v1250 = vunpack.c.l.b16 %v1090
    %v1251 = vunpack.c.l.b16 %v1091
    %v1252 = vunpack.c.l.b16 %v1092
    %v1253 = vunpack.c.l.b16 %v1093
    %v1254 = vpack.c.b16 %v1223, %v1222
    %v1255 = vpack.c.b16 %v1225, %v1224
    %v1256 = vpack.c.b16 %v1227, %v1226
    %v1257 = vpack.c.b16 %v1229, %v1228
    %v1258 = vpack.c.b16 %v1231, %v1230
    %v1259 = vpack.c.b16 %v1233, %v1232
    %v1260 = vpack.c.b16 %v1235, %v1234
    %v1261 = vpack.c.b16 %v1237, %v1236
    %v1262 = vpack.c.b16 %v1239, %v1238
    %v1263 = vpack.c.b16 %v1241, %v1240
    %v1264 = vpack.c.b16 %v1243, %v1242
    %v1265 = vpack.c.b16 %v1245, %v1244
    %v1266 = vpack.c.b16 %v1247, %v1246
    %v1267 = vpack.c.b16 %v1249, %v1248
    %v1268 = vpack.c.b16 %v1251, %v1250
    %v1269 = vpack.c.b16 %v1253, %v1252
    %v1318 = vunpack.c.l.b16 %v1030
    %v1319 = vunpack.c.l.b16 %v1031
    %v1320 = vunpack.c.l.b16 %v1032
    %v1321 = vunpack.c.l.b16 %v1033
    %v1322 = vunpack.c.l.b16 %v1034
    %v1323 = vunpack.c.l.b16 %v1035
    %v1324 = vunpack.c.l.b16 %v1036
    %v1325 = vunpack.c.l.b16 %v1037
    %v1326 = vunpack.c.l.b16 %v1038
    %v1327 = vunpack.c.l.b16 %v1039
    %v1328 = vunpack.c.l.b16 %v1040
    %v1329 = vunpack.c.l.b16 %v1041
    %v1330 = vunpack.c.l.b16 %v1042
    %v1331 = vunpack.c.l.b16 %v1043
    %v1332 = vunpack.c.l.b16 %v1044
    %v1333 = vunpack.c.l.b16 %v1045
    %v1334 = vunpack.c.l.b16 %v1046
    %v1335 = vunpack.c.l.b16 %v1047
    %v1336 = vunpack.c.l.b16 %v1048
    %v1337 = vunpack.c.l.b16 %v1049
    %v1338 = vunpack.c.l.b16 %v1050
    %v1339 = vunpack.c.l.b16 %v1051
    %v1340 = vunpack.c.l.b16 %v1052
    %v1341 = vunpack.c.l.b16 %v1053
    %v1342 = vunpack.c.l.b16 %v1054
    %v1343 = vunpack.c.l.b16 %v1055
    %v1344 = vunpack.c.l.b16 %v1056
    %v1345 = vunpack.c.l.b16 %v1057
    %v1346 = vunpack.c.l.b16 %v1058
    %v1347 = vunpack.c.l.b16 %v1059
    %v1348 = vunpack.c.l.b16 %v1060
    %v1349 = vunpack.c.l.b16 %v1061
    %v1350 = vpack.c.b16 %v1319, %v1318
    %v1351 = vpack.c.b16 %v1321, %v1320
    %v1352 = vpack.c.b16 %v1323, %v1322
    %v1353 = vpack.c.b16 %v1325, %v1324
    %v1354 = vpack.c.b16 %v1327, %v1326
    %v1355 = vpack.c.b16 %v1329, %v1328
    %v1356 = vpack.c.b16 %v1331, %v1330
    %v1357 = vpack.c.b16 %v1333, %v1332
    %v1358 = vpack.c.b16 %v1335, %v1334
    %v1359 = vpack.c.b16 %v1337, %v1336
    %v1360 = vpack.c.b16 %v1339, %v1338
    %v1361 = vpack.c.b16 %v1341, %v1340
    %v1362 = vpack.c.b16 %v1343, %v1342
    %v1363 = vpack.c.b16 %v1345, %v1344
    %v1364 = vpack.c.b16 %v1347, %v1346
    %v1365 = vpack.c.b16 %v1349, %v1348
    %v1382 = vld [vmem:[%s4] sm:$0xf]
    %v1383 = vld [vmem:[%s4 + $0x4] sm:$0xf]
    %v1384 = vld [vmem:[%s4 + $0x8] sm:$0xf]
    %v1385 = vld [vmem:[%s4 + $0xc] sm:$0xf]
    %v1386 = vld [vmem:[%s4 + $0x10] sm:$0xf]
    %v1387 = vld [vmem:[%s4 + $0x14] sm:$0xf]
    %v1388 = vld [vmem:[%s4 + $0x18] sm:$0xf]
    %v1389 = vld [vmem:[%s4 + $0x1c] sm:$0xf]
    %v1390 = vld [vmem:[%s4 + $0x20] sm:$0xf]
    %v1391 = vld [vmem:[%s4 + $0x24] sm:$0xf]
    %v1392 = vld [vmem:[%s4 + $0x28] sm:$0xf]
    %v1393 = vld [vmem:[%s4 + $0x2c] sm:$0xf]
    %v1394 = vld [vmem:[%s4 + $0x30] sm:$0xf]
    %v1395 = vld [vmem:[%s4 + $0x34] sm:$0xf]
    %v1396 = vld [vmem:[%s4 + $0x38] sm:$0xf]
    %v1397 = vld [vmem:[%s4 + $0x3c] sm:$0xf]
    %v1398 = vld [vmem:[%s4 + $0x40] sm:$0xf]
    %v1399 = vld [vmem:[%s4 + $0x44] sm:$0xf]
    %v1400 = vld [vmem:[%s4 + $0x48] sm:$0xf]
    %v1401 = vld [vmem:[%s4 + $0x4c] sm:$0xf]
    %v1402 = vld [vmem:[%s4 + $0x50] sm:$0xf]
    %v1403 = vld [vmem:[%s4 + $0x54] sm:$0xf]
    %v1404 = vld [vmem:[%s4 + $0x58] sm:$0xf]
    %v1405 = vld [vmem:[%s4 + $0x5c] sm:$0xf]
    %v1406 = vld [vmem:[%s4 + $0x60] sm:$0xf]
    %v1407 = vld [vmem:[%s4 + $0x64] sm:$0xf]
    %v1408 = vld [vmem:[%s4 + $0x68] sm:$0xf]
    %v1409 = vld [vmem:[%s4 + $0x6c] sm:$0xf]
    %v1410 = vld [vmem:[%s4 + $0x70] sm:$0xf]
    %v1411 = vld [vmem:[%s4 + $0x74] sm:$0xf]
    %v1412 = vld [vmem:[%s4 + $0x78] sm:$0xf]
    %v1413 = vld [vmem:[%s4 + $0x7c] sm:$0xf]
    %v1414 = vld [vmem:[%s4 + $0x80] sm:$0xf]
    %v1415 = vld [vmem:[%s4 + $0x84] sm:$0xf]
    %v1416 = vld [vmem:[%s4 + $0x88] sm:$0xf]
    %v1417 = vld [vmem:[%s4 + $0x8c] sm:$0xf]
    %v1418 = vld [vmem:[%s4 + $0x90] sm:$0xf]
    %v1419 = vld [vmem:[%s4 + $0x94] sm:$0xf]
    %v1420 = vld [vmem:[%s4 + $0x98] sm:$0xf]
    %v1421 = vld [vmem:[%s4 + $0x9c] sm:$0xf]
    %v1422 = vld [vmem:[%s4 + $0xa0] sm:$0xf]
    %v1423 = vld [vmem:[%s4 + $0xa4] sm:$0xf]
    %v1424 = vld [vmem:[%s4 + $0xa8] sm:$0xf]
    %v1425 = vld [vmem:[%s4 + $0xac] sm:$0xf]
    %v1426 = vld [vmem:[%s4 + $0xb0] sm:$0xf]
    %v1427 = vld [vmem:[%s4 + $0xb4] sm:$0xf]
    %v1428 = vld [vmem:[%s4 + $0xb8] sm:$0xf]
    %v1429 = vld [vmem:[%s4 + $0xbc] sm:$0xf]
    %v1478 = vunpack.c.l.b16 %v1382
    %v1479 = vunpack.c.l.b16 %v1383
    %v1480 = vunpack.c.l.b16 %v1384
    %v1481 = vunpack.c.l.b16 %v1385
    %v1482 = vunpack.c.l.b16 %v1386
    %v1483 = vunpack.c.l.b16 %v1387
    %v1484 = vunpack.c.l.b16 %v1388
    %v1485 = vunpack.c.l.b16 %v1389
    %v1486 = vunpack.c.l.b16 %v1390
    %v1487 = vunpack.c.l.b16 %v1391
    %v1488 = vunpack.c.l.b16 %v1392
    %v1489 = vunpack.c.l.b16 %v1393
    %v1490 = vunpack.c.l.b16 %v1394
    %v1491 = vunpack.c.l.b16 %v1395
    %v1492 = vunpack.c.l.b16 %v1396
    %v1493 = vunpack.c.l.b16 %v1397
    %v1494 = vunpack.c.l.b16 %v1398
    %v1495 = vunpack.c.l.b16 %v1399
    %v1496 = vunpack.c.l.b16 %v1400
    %v1497 = vunpack.c.l.b16 %v1401
    %v1498 = vunpack.c.l.b16 %v1402
    %v1499 = vunpack.c.l.b16 %v1403
    %v1500 = vunpack.c.l.b16 %v1404
    %v1501 = vunpack.c.l.b16 %v1405
    %v1502 = vunpack.c.l.b16 %v1406
    %v1503 = vunpack.c.l.b16 %v1407
    %v1504 = vunpack.c.l.b16 %v1408
    %v1505 = vunpack.c.l.b16 %v1409
    %v1506 = vunpack.c.l.b16 %v1410
    %v1507 = vunpack.c.l.b16 %v1411
    %v1508 = vunpack.c.l.b16 %v1412
    %v1509 = vunpack.c.l.b16 %v1413
    %v1510 = vunpack.c.l.b16 %v1414
    %v1511 = vunpack.c.l.b16 %v1415
    %v1512 = vunpack.c.l.b16 %v1416
    %v1513 = vunpack.c.l.b16 %v1417
    %v1514 = vunpack.c.l.b16 %v1418
    %v1515 = vunpack.c.l.b16 %v1419
    %v1516 = vunpack.c.l.b16 %v1420
    %v1517 = vunpack.c.l.b16 %v1421
    %v1518 = vunpack.c.l.b16 %v1422
    %v1519 = vunpack.c.l.b16 %v1423
    %v1520 = vunpack.c.l.b16 %v1424
    %v1521 = vunpack.c.l.b16 %v1425
    %v1522 = vunpack.c.l.b16 %v1426
    %v1523 = vunpack.c.l.b16 %v1427
    %v1524 = vunpack.c.l.b16 %v1428
    %v1525 = vunpack.c.l.b16 %v1429
    %v1526 = vpack.c.b16 %v1479, %v1478
    %v1527 = vpack.c.b16 %v1481, %v1480
    %v1528 = vpack.c.b16 %v1483, %v1482
    %v1529 = vpack.c.b16 %v1485, %v1484
    %v1530 = vpack.c.b16 %v1487, %v1486
    %v1531 = vpack.c.b16 %v1489, %v1488
    %v1532 = vpack.c.b16 %v1491, %v1490
    %v1533 = vpack.c.b16 %v1493, %v1492
    %v1534 = vpack.c.b16 %v1495, %v1494
    %v1535 = vpack.c.b16 %v1497, %v1496
    %v1536 = vpack.c.b16 %v1499, %v1498
    %v1537 = vpack.c.b16 %v1501, %v1500
    %v1538 = vpack.c.b16 %v1503, %v1502
    %v1539 = vpack.c.b16 %v1505, %v1504
    %v1540 = vpack.c.b16 %v1507, %v1506
    %v1541 = vpack.c.b16 %v1509, %v1508
    %v1542 = vpack.c.b16 %v1511, %v1510
    %v1543 = vpack.c.b16 %v1513, %v1512
    %v1544 = vpack.c.b16 %v1515, %v1514
    %v1545 = vpack.c.b16 %v1517, %v1516
    %v1546 = vpack.c.b16 %v1519, %v1518
    %v1547 = vpack.c.b16 %v1521, %v1520
    %v1548 = vpack.c.b16 %v1523, %v1522
    %v1549 = vpack.c.b16 %v1525, %v1524
    %1574 = vmatpush.bf16.msra.mxu0 %v1533
    %1575 = vmatpush.bf16.msra.mxu0 %v1532
    %1576 = vmatpush.bf16.msra.mxu0 %v1531
    %1577 = vmatpush.bf16.msra.mxu0 %v1530
    %1578 = vmatpush.bf16.msra.mxu0 %v1529
    %1579 = vmatpush.bf16.msra.mxu0 %v1528
    %1580 = vmatpush.bf16.msra.mxu0 %v1527
    %1581 = vmatpush.bf16.msra.mxu0 %v1526
    %1582 = vmatmul.bf16.gmra.mxu0 %v1158
    %v1583 = vpop.f32.mrf.mxu0
    %v1584 = vadd.f32 0.0, %v1583
    %v1585 = vpop.f32.mrf.mxu0
    %v1586 = vadd.f32 0.0, %v1585
    %1587 = vmatmul.bf16.gmra.mxu0 %v1159
    %v1588 = vpop.f32.mrf.mxu0
    %v1589 = vadd.f32 0.0, %v1588
    %v1590 = vpop.f32.mrf.mxu0
    %v1591 = vadd.f32 0.0, %v1590
    %1592 = vmatmul.bf16.gmra.mxu0 %v1160
    %v1593 = vpop.f32.mrf.mxu0
    %v1594 = vadd.f32 0.0, %v1593
    %v1595 = vpop.f32.mrf.mxu0
    %v1596 = vadd.f32 0.0, %v1595
    %1597 = vmatmul.bf16.gmra.mxu0 %v1161
    %v1598 = vpop.f32.mrf.mxu0
    %v1599 = vadd.f32 0.0, %v1598
    %v1600 = vpop.f32.mrf.mxu0
    %v1601 = vadd.f32 0.0, %v1600
    %1602 = vmatmul.bf16.gmra.mxu0 %v1162
    %v1603 = vpop.f32.mrf.mxu0
    %v1604 = vadd.f32 0.0, %v1603
    %v1605 = vpop.f32.mrf.mxu0
    %v1606 = vadd.f32 0.0, %v1605
    %1607 = vmatmul.bf16.gmra.mxu0 %v1163
    %v1608 = vpop.f32.mrf.mxu0
    %v1609 = vadd.f32 0.0, %v1608
    %v1610 = vpop.f32.mrf.mxu0
    %v1611 = vadd.f32 0.0, %v1610
    %1612 = vmatmul.bf16.gmra.mxu0 %v1164
    %v1613 = vpop.f32.mrf.mxu0
    %v1614 = vadd.f32 0.0, %v1613
    %v1615 = vpop.f32.mrf.mxu0
    %v1616 = vadd.f32 0.0, %v1615
    %1617 = vmatmul.bf16.gmra.mxu0 %v1165
    %v1618 = vpop.f32.mrf.mxu0
    %v1619 = vadd.f32 0.0, %v1618
    %v1620 = vpop.f32.mrf.mxu0
    %v1621 = vadd.f32 0.0, %v1620
    %1622 = vmatmul.bf16.gmra.mxu0 %v1166
    %v1623 = vpop.f32.mrf.mxu0
    %v1624 = vadd.f32 0.0, %v1623
    %v1625 = vpop.f32.mrf.mxu0
    %v1626 = vadd.f32 0.0, %v1625
    %1627 = vmatmul.bf16.gmra.mxu0 %v1167
    %v1628 = vpop.f32.mrf.mxu0
    %v1629 = vadd.f32 0.0, %v1628
    %v1630 = vpop.f32.mrf.mxu0
    %v1631 = vadd.f32 0.0, %v1630
    %1632 = vmatmul.bf16.gmra.mxu0 %v1168
    %v1633 = vpop.f32.mrf.mxu0
    %v1634 = vadd.f32 0.0, %v1633
    %v1635 = vpop.f32.mrf.mxu0
    %v1636 = vadd.f32 0.0, %v1635
    %1637 = vmatmul.bf16.gmra.mxu0 %v1169
    %v1638 = vpop.f32.mrf.mxu0
    %v1639 = vadd.f32 0.0, %v1638
    %v1640 = vpop.f32.mrf.mxu0
    %v1641 = vadd.f32 0.0, %v1640
    %1642 = vmatmul.bf16.gmra.mxu0 %v1170
    %v1643 = vpop.f32.mrf.mxu0
    %v1644 = vadd.f32 0.0, %v1643
    %v1645 = vpop.f32.mrf.mxu0
    %v1646 = vadd.f32 0.0, %v1645
    %1647 = vmatmul.bf16.gmra.mxu0 %v1171
    %v1648 = vpop.f32.mrf.mxu0
    %v1649 = vadd.f32 0.0, %v1648
    %v1650 = vpop.f32.mrf.mxu0
    %v1651 = vadd.f32 0.0, %v1650
    %1652 = vmatmul.bf16.gmra.mxu0 %v1172
    %v1653 = vpop.f32.mrf.mxu0
    %v1654 = vadd.f32 0.0, %v1653
    %v1655 = vpop.f32.mrf.mxu0
    %v1656 = vadd.f32 0.0, %v1655
    %1657 = vmatmul.bf16.gmra.mxu0 %v1173
    %v1658 = vpop.f32.mrf.mxu0
    %v1659 = vadd.f32 0.0, %v1658
    %v1660 = vpop.f32.mrf.mxu0
    %v1661 = vadd.f32 0.0, %v1660
    %1662 = vdwg.mxu0
    %1663 = vmatpush.bf16.msra.mxu0 %v1541
    %1664 = vmatpush.bf16.msra.mxu0 %v1540
    %1665 = vmatpush.bf16.msra.mxu0 %v1539
    %1666 = vmatpush.bf16.msra.mxu0 %v1538
    %1667 = vmatpush.bf16.msra.mxu0 %v1537
    %1668 = vmatpush.bf16.msra.mxu0 %v1536
    %1669 = vmatpush.bf16.msra.mxu0 %v1535
    %1670 = vmatpush.bf16.msra.mxu0 %v1534
    %1671 = vmatmul.bf16.gmra.mxu0 %v1254
    %v1672 = vpop.f32.mrf.mxu0
    %v1673 = vadd.f32 %v1584, %v1672
    %v1674 = vpop.f32.mrf.mxu0
    %v1675 = vadd.f32 %v1586, %v1674
    %1676 = vmatmul.bf16.gmra.mxu0 %v1255
    %v1677 = vpop.f32.mrf.mxu0
    %v1678 = vadd.f32 %v1589, %v1677
    %v1679 = vpop.f32.mrf.mxu0
    %v1680 = vadd.f32 %v1591, %v1679
    %1681 = vmatmul.bf16.gmra.mxu0 %v1256
    %v1682 = vpop.f32.mrf.mxu0
    %v1683 = vadd.f32 %v1594, %v1682
    %v1684 = vpop.f32.mrf.mxu0
    %v1685 = vadd.f32 %v1596, %v1684
    %1686 = vmatmul.bf16.gmra.mxu0 %v1257
    %v1687 = vpop.f32.mrf.mxu0
    %v1688 = vadd.f32 %v1599, %v1687
    %v1689 = vpop.f32.mrf.mxu0
    %v1690 = vadd.f32 %v1601, %v1689
    %1691 = vmatmul.bf16.gmra.mxu0 %v1258
    %v1692 = vpop.f32.mrf.mxu0
    %v1693 = vadd.f32 %v1604, %v1692
    %v1694 = vpop.f32.mrf.mxu0
    %v1695 = vadd.f32 %v1606, %v1694
    %1696 = vmatmul.bf16.gmra.mxu0 %v1259
    %v1697 = vpop.f32.mrf.mxu0
    %v1698 = vadd.f32 %v1609, %v1697
    %v1699 = vpop.f32.mrf.mxu0
    %v1700 = vadd.f32 %v1611, %v1699
    %1701 = vmatmul.bf16.gmra.mxu0 %v1260
    %v1702 = vpop.f32.mrf.mxu0
    %v1703 = vadd.f32 %v1614, %v1702
    %v1704 = vpop.f32.mrf.mxu0
    %v1705 = vadd.f32 %v1616, %v1704
    %1706 = vmatmul.bf16.gmra.mxu0 %v1261
    %v1707 = vpop.f32.mrf.mxu0
    %v1708 = vadd.f32 %v1619, %v1707
    %v1709 = vpop.f32.mrf.mxu0
    %v1710 = vadd.f32 %v1621, %v1709
    %1711 = vmatmul.bf16.gmra.mxu0 %v1262
    %v1712 = vpop.f32.mrf.mxu0
    %v1713 = vadd.f32 %v1624, %v1712
    %v1714 = vpop.f32.mrf.mxu0
    %v1715 = vadd.f32 %v1626, %v1714
    %1716 = vmatmul.bf16.gmra.mxu0 %v1263
    %v1717 = vpop.f32.mrf.mxu0
    %v1718 = vadd.f32 %v1629, %v1717
    %v1719 = vpop.f32.mrf.mxu0
    %v1720 = vadd.f32 %v1631, %v1719
    %1721 = vmatmul.bf16.gmra.mxu0 %v1264
    %v1722 = vpop.f32.mrf.mxu0
    %v1723 = vadd.f32 %v1634, %v1722
    %v1724 = vpop.f32.mrf.mxu0
    %v1725 = vadd.f32 %v1636, %v1724
    %1726 = vmatmul.bf16.gmra.mxu0 %v1265
    %v1727 = vpop.f32.mrf.mxu0
    %v1728 = vadd.f32 %v1639, %v1727
    %v1729 = vpop.f32.mrf.mxu0
    %v1730 = vadd.f32 %v1641, %v1729
    %1731 = vmatmul.bf16.gmra.mxu0 %v1266
    %v1732 = vpop.f32.mrf.mxu0
    %v1733 = vadd.f32 %v1644, %v1732
    %v1734 = vpop.f32.mrf.mxu0
    %v1735 = vadd.f32 %v1646, %v1734
    %1736 = vmatmul.bf16.gmra.mxu0 %v1267
    %v1737 = vpop.f32.mrf.mxu0
    %v1738 = vadd.f32 %v1649, %v1737
    %v1739 = vpop.f32.mrf.mxu0
    %v1740 = vadd.f32 %v1651, %v1739
    %1741 = vmatmul.bf16.gmra.mxu0 %v1268
    %v1742 = vpop.f32.mrf.mxu0
    %v1743 = vadd.f32 %v1654, %v1742
    %v1744 = vpop.f32.mrf.mxu0
    %v1745 = vadd.f32 %v1656, %v1744
    %1746 = vmatmul.bf16.gmra.mxu0 %v1269
    %v1747 = vpop.f32.mrf.mxu0
    %v1748 = vadd.f32 %v1659, %v1747
    %v1749 = vpop.f32.mrf.mxu0
    %v1750 = vadd.f32 %v1661, %v1749
    %1751 = vdwg.mxu0
    %1752 = vmatpush.bf16.msra.mxu0 %v1549
    %1753 = vmatpush.bf16.msra.mxu0 %v1548
    %1754 = vmatpush.bf16.msra.mxu0 %v1547
    %1755 = vmatpush.bf16.msra.mxu0 %v1546
    %1756 = vmatpush.bf16.msra.mxu0 %v1545
    %1757 = vmatpush.bf16.msra.mxu0 %v1544
    %1758 = vmatpush.bf16.msra.mxu0 %v1543
    %1759 = vmatpush.bf16.msra.mxu0 %v1542
    %1760 = vmatmul.bf16.gmra.mxu0 %v1350
    %v1761 = vpop.f32.mrf.mxu0
    %v1762 = vadd.f32 %v1673, %v1761
    %v1763 = vpop.f32.mrf.mxu0
    %v1764 = vadd.f32 %v1675, %v1763
    %1765 = vmatmul.bf16.gmra.mxu0 %v1351
    %v1766 = vpop.f32.mrf.mxu0
    %v1767 = vadd.f32 %v1678, %v1766
    %v1768 = vpop.f32.mrf.mxu0
    %v1769 = vadd.f32 %v1680, %v1768
    %1770 = vmatmul.bf16.gmra.mxu0 %v1352
    %v1771 = vpop.f32.mrf.mxu0
    %v1772 = vadd.f32 %v1683, %v1771
    %v1773 = vpop.f32.mrf.mxu0
    %v1774 = vadd.f32 %v1685, %v1773
    %1775 = vmatmul.bf16.gmra.mxu0 %v1353
    %v1776 = vpop.f32.mrf.mxu0
    %v1777 = vadd.f32 %v1688, %v1776
    %v1778 = vpop.f32.mrf.mxu0
    %v1779 = vadd.f32 %v1690, %v1778
    %1780 = vmatmul.bf16.gmra.mxu0 %v1354
    %v1781 = vpop.f32.mrf.mxu0
    %v1782 = vadd.f32 %v1693, %v1781
    %v1783 = vpop.f32.mrf.mxu0
    %v1784 = vadd.f32 %v1695, %v1783
    %1785 = vmatmul.bf16.gmra.mxu0 %v1355
    %v1786 = vpop.f32.mrf.mxu0
    %v1787 = vadd.f32 %v1698, %v1786
    %v1788 = vpop.f32.mrf.mxu0
    %v1789 = vadd.f32 %v1700, %v1788
    %1790 = vmatmul.bf16.gmra.mxu0 %v1356
    %v1791 = vpop.f32.mrf.mxu0
    %v1792 = vadd.f32 %v1703, %v1791
    %v1793 = vpop.f32.mrf.mxu0
    %v1794 = vadd.f32 %v1705, %v1793
    %1795 = vmatmul.bf16.gmra.mxu0 %v1357
    %v1796 = vpop.f32.mrf.mxu0
    %v1797 = vadd.f32 %v1708, %v1796
    %v1798 = vpop.f32.mrf.mxu0
    %v1799 = vadd.f32 %v1710, %v1798
    %1800 = vmatmul.bf16.gmra.mxu0 %v1358
    %v1801 = vpop.f32.mrf.mxu0
    %v1802 = vadd.f32 %v1713, %v1801
    %v1803 = vpop.f32.mrf.mxu0
    %v1804 = vadd.f32 %v1715, %v1803
    %1805 = vmatmul.bf16.gmra.mxu0 %v1359
    %v1806 = vpop.f32.mrf.mxu0
    %v1807 = vadd.f32 %v1718, %v1806
    %v1808 = vpop.f32.mrf.mxu0
    %v1809 = vadd.f32 %v1720, %v1808
    %1810 = vmatmul.bf16.gmra.mxu0 %v1360
    %v1811 = vpop.f32.mrf.mxu0
    %v1812 = vadd.f32 %v1723, %v1811
    %v1813 = vpop.f32.mrf.mxu0
    %v1814 = vadd.f32 %v1725, %v1813
    %1815 = vmatmul.bf16.gmra.mxu0 %v1361
    %v1816 = vpop.f32.mrf.mxu0
    %v1817 = vadd.f32 %v1728, %v1816
    %v1818 = vpop.f32.mrf.mxu0
    %v1819 = vadd.f32 %v1730, %v1818
    %1820 = vmatmul.bf16.gmra.mxu0 %v1362
    %v1821 = vpop.f32.mrf.mxu0
    %v1822 = vadd.f32 %v1733, %v1821
    %v1823 = vpop.f32.mrf.mxu0
    %v1824 = vadd.f32 %v1735, %v1823
    %1825 = vmatmul.bf16.gmra.mxu0 %v1363
    %v1826 = vpop.f32.mrf.mxu0
    %v1827 = vadd.f32 %v1738, %v1826
    %v1828 = vpop.f32.mrf.mxu0
    %v1829 = vadd.f32 %v1740, %v1828
    %1830 = vmatmul.bf16.gmra.mxu0 %v1364
    %v1831 = vpop.f32.mrf.mxu0
    %v1832 = vadd.f32 %v1743, %v1831
    %v1833 = vpop.f32.mrf.mxu0
    %v1834 = vadd.f32 %v1745, %v1833
    %1835 = vmatmul.bf16.gmra.mxu0 %v1365
    %v1836 = vpop.f32.mrf.mxu0
    %v1837 = vadd.f32 %v1748, %v1836
    %v1838 = vpop.f32.mrf.mxu0
    %v1839 = vadd.f32 %v1750, %v1838
    %1840 = vdwg.mxu0
    %v1841 = vld [vmem:[%s5] sm:$0x1]
    %v1842 = vld [vmem:[%s6] sm:$0x1]
    %v1843 = vadd.f32 %v1762, %v1764
    %v1844 = vadd.f32 %v1843, %v1767
    %v1845 = vadd.f32 %v1844, %v1769
    %v1846 = vadd.f32 %v1845, %v1772
    %v1847 = vadd.f32 %v1846, %v1774
    %v1848 = vadd.f32 %v1847, %v1777
    %v1849 = vadd.f32 %v1848, %v1779
    %v1850 = vadd.f32 %v1849, %v1782
    %v1851 = vadd.f32 %v1850, %v1784
    %v1852 = vadd.f32 %v1851, %v1787
    %v1853 = vadd.f32 %v1852, %v1789
    %v1854 = vadd.f32 %v1853, %v1792
    %v1855 = vadd.f32 %v1854, %v1794
    %v1856 = vadd.f32 %v1855, %v1797
    %v1857 = vadd.f32 %v1856, %v1799
    %v1858 = vadd.f32 %v1857, %v1802
    %v1859 = vadd.f32 %v1858, %v1804
    %v1860 = vadd.f32 %v1859, %v1807
    %v1861 = vadd.f32 %v1860, %v1809
    %v1862 = vadd.f32 %v1861, %v1812
    %v1863 = vadd.f32 %v1862, %v1814
    %v1864 = vadd.f32 %v1863, %v1817
    %v1865 = vadd.f32 %v1864, %v1819
    %v1866 = vadd.f32 %v1865, %v1822
    %v1867 = vadd.f32 %v1866, %v1824
    %v1868 = vadd.f32 %v1867, %v1827
    %v1869 = vadd.f32 %v1868, %v1829
    %v1870 = vadd.f32 %v1869, %v1832
    %v1871 = vadd.f32 %v1870, %v1834
    %v1872 = vadd.f32 %v1871, %v1837
    %v1873 = vadd.f32 %v1872, %v1839
    %v1874 = vrot.slane %v1873, 4
    %v1875 = vadd.f32 %v1873, %v1874
    %v1876 = vrot.slane %v1875, 2
    %v1877 = vadd.f32 %v1875, %v1876
    %v1878 = vrot.slane %v1877, 1
    %v1879 = vadd.f32 %v1877, %v1878
    %v1880 = vmul.f32 %v1762, %v1762
    %v1881 = vmul.f32 %v1764, %v1764
    %v1882 = vmul.f32 %v1767, %v1767
    %v1883 = vmul.f32 %v1769, %v1769
    %v1884 = vmul.f32 %v1772, %v1772
    %v1885 = vmul.f32 %v1774, %v1774
    %v1886 = vmul.f32 %v1777, %v1777
    %v1887 = vmul.f32 %v1779, %v1779
    %v1888 = vmul.f32 %v1782, %v1782
    %v1889 = vmul.f32 %v1784, %v1784
    %v1890 = vmul.f32 %v1787, %v1787
    %v1891 = vmul.f32 %v1789, %v1789
    %v1892 = vmul.f32 %v1792, %v1792
    %v1893 = vmul.f32 %v1794, %v1794
    %v1894 = vmul.f32 %v1797, %v1797
    %v1895 = vmul.f32 %v1799, %v1799
    %v1896 = vmul.f32 %v1802, %v1802
    %v1897 = vmul.f32 %v1804, %v1804
    %v1898 = vmul.f32 %v1807, %v1807
    %v1899 = vmul.f32 %v1809, %v1809
    %v1900 = vmul.f32 %v1812, %v1812
    %v1901 = vmul.f32 %v1814, %v1814
    %v1902 = vmul.f32 %v1817, %v1817
    %v1903 = vmul.f32 %v1819, %v1819
    %v1904 = vmul.f32 %v1822, %v1822
    %v1905 = vmul.f32 %v1824, %v1824
    %v1906 = vmul.f32 %v1827, %v1827
    %v1907 = vmul.f32 %v1829, %v1829
    %v1908 = vmul.f32 %v1832, %v1832
    %v1909 = vmul.f32 %v1834, %v1834
    %v1910 = vmul.f32 %v1837, %v1837
    %v1911 = vmul.f32 %v1839, %v1839
    %v1912 = vadd.f32 %v1880, %v1881
    %v1913 = vadd.f32 %v1912, %v1882
    %v1914 = vadd.f32 %v1913, %v1883
    %v1915 = vadd.f32 %v1914, %v1884
    %v1916 = vadd.f32 %v1915, %v1885
    %v1917 = vadd.f32 %v1916, %v1886
    %v1918 = vadd.f32 %v1917, %v1887
    %v1919 = vadd.f32 %v1918, %v1888
    %v1920 = vadd.f32 %v1919, %v1889
    %v1921 = vadd.f32 %v1920, %v1890
    %v1922 = vadd.f32 %v1921, %v1891
    %v1923 = vadd.f32 %v1922, %v1892
    %v1924 = vadd.f32 %v1923, %v1893
    %v1925 = vadd.f32 %v1924, %v1894
    %v1926 = vadd.f32 %v1925, %v1895
    %v1927 = vadd.f32 %v1926, %v1896
    %v1928 = vadd.f32 %v1927, %v1897
    %v1929 = vadd.f32 %v1928, %v1898
    %v1930 = vadd.f32 %v1929, %v1899
    %v1931 = vadd.f32 %v1930, %v1900
    %v1932 = vadd.f32 %v1931, %v1901
    %v1933 = vadd.f32 %v1932, %v1902
    %v1934 = vadd.f32 %v1933, %v1903
    %v1935 = vadd.f32 %v1934, %v1904
    %v1936 = vadd.f32 %v1935, %v1905
    %v1937 = vadd.f32 %v1936, %v1906
    %v1938 = vadd.f32 %v1937, %v1907
    %v1939 = vadd.f32 %v1938, %v1908
    %v1940 = vadd.f32 %v1939, %v1909
    %v1941 = vadd.f32 %v1940, %v1910
    %v1942 = vadd.f32 %v1941, %v1911
    %v1943 = vrot.slane %v1942, 4
    %v1944 = vadd.f32 %v1942, %v1943
    %v1945 = vrot.slane %v1944, 2
    %v1946 = vadd.f32 %v1944, %v1945
    %v1947 = vrot.slane %v1946, 1
    %v1948 = vadd.f32 %v1946, %v1947
    %v1949 = vmul.f32 %v1879, 0.00390625
    %v1950 = vmul.f32 %v1948, 0.00390625
    %v1951 = vmul.f32 %v1949, %v1949
    %v1952 = vsub.f32 %v1950, %v1951
    %v1953 = vmax.f32 %v1952, 0.0
    %v1954 = vadd.f32 %v1953, 1e-05
    %v1955 = vrsqrt.pop %v1954
    %v1956 = vmul.f32 %v1955, %v1954
    %v1957 = vmul.f32 %v1956, %v1955
    %v1958 = vmul.f32 0.5, %v1957
    %v1959 = vsub.f32 1.5, %v1958
    %v1960 = vmul.f32 %v1955, %v1959
    %vm1961 = vweird.f32 %v1954
    %vm1962 = vweird.f32 %v1955
    %vm1963 = vmor %vm1961, %vm1962
    %v1964 = vsel %vm1963, %v1955, %v1960
    %v1965 = vmul.f32 %v1841, %v1964
    %v1966 = vmul.f32 %v1949, %v1965
    %v1967 = vsub.f32 %v1842, %v1966
    %v1969 = vperm.slane %v1965, 0
    %v1971 = vmul.f32 %v1762, %v1969
    %v1972 = vmul.f32 %v1764, %v1969
    %v1973 = vmul.f32 %v1767, %v1969
    %v1974 = vmul.f32 %v1769, %v1969
    %v1975 = vmul.f32 %v1772, %v1969
    %v1976 = vmul.f32 %v1774, %v1969
    %v1977 = vmul.f32 %v1777, %v1969
    %v1978 = vmul.f32 %v1779, %v1969
    %v1979 = vmul.f32 %v1782, %v1969
    %v1980 = vmul.f32 %v1784, %v1969
    %v1981 = vmul.f32 %v1787, %v1969
    %v1982 = vmul.f32 %v1789, %v1969
    %v1983 = vmul.f32 %v1792, %v1969
    %v1984 = vmul.f32 %v1794, %v1969
    %v1985 = vmul.f32 %v1797, %v1969
    %v1986 = vmul.f32 %v1799, %v1969
    %v1987 = vmul.f32 %v1802, %v1969
    %v1988 = vmul.f32 %v1804, %v1969
    %v1989 = vmul.f32 %v1807, %v1969
    %v1990 = vmul.f32 %v1809, %v1969
    %v1991 = vmul.f32 %v1812, %v1969
    %v1992 = vmul.f32 %v1814, %v1969
    %v1993 = vmul.f32 %v1817, %v1969
    %v1994 = vmul.f32 %v1819, %v1969
    %v1995 = vmul.f32 %v1822, %v1969
    %v1996 = vmul.f32 %v1824, %v1969
    %v1997 = vmul.f32 %v1827, %v1969
    %v1998 = vmul.f32 %v1829, %v1969
    %v1999 = vmul.f32 %v1832, %v1969
    %v2000 = vmul.f32 %v1834, %v1969
    %v2001 = vmul.f32 %v1837, %v1969
    %v2002 = vmul.f32 %v1839, %v1969
    %v2004 = vperm.slane %v1967, 0
    %v2006 = vadd.f32 %v1971, %v2004
    %v2007 = vadd.f32 %v1972, %v2004
    %v2008 = vadd.f32 %v1973, %v2004
    %v2009 = vadd.f32 %v1974, %v2004
    %v2010 = vadd.f32 %v1975, %v2004
    %v2011 = vadd.f32 %v1976, %v2004
    %v2012 = vadd.f32 %v1977, %v2004
    %v2013 = vadd.f32 %v1978, %v2004
    %v2014 = vadd.f32 %v1979, %v2004
    %v2015 = vadd.f32 %v1980, %v2004
    %v2016 = vadd.f32 %v1981, %v2004
    %v2017 = vadd.f32 %v1982, %v2004
    %v2018 = vadd.f32 %v1983, %v2004
    %v2019 = vadd.f32 %v1984, %v2004
    %v2020 = vadd.f32 %v1985, %v2004
    %v2021 = vadd.f32 %v1986, %v2004
    %v2022 = vadd.f32 %v1987, %v2004
    %v2023 = vadd.f32 %v1988, %v2004
    %v2024 = vadd.f32 %v1989, %v2004
    %v2025 = vadd.f32 %v1990, %v2004
    %v2026 = vadd.f32 %v1991, %v2004
    %v2027 = vadd.f32 %v1992, %v2004
    %v2028 = vadd.f32 %v1993, %v2004
    %v2029 = vadd.f32 %v1994, %v2004
    %v2030 = vadd.f32 %v1995, %v2004
    %v2031 = vadd.f32 %v1996, %v2004
    %v2032 = vadd.f32 %v1997, %v2004
    %v2033 = vadd.f32 %v1998, %v2004
    %v2034 = vadd.f32 %v1999, %v2004
    %v2035 = vadd.f32 %v2000, %v2004
    %v2036 = vadd.f32 %v2001, %v2004
    %v2037 = vadd.f32 %v2002, %v2004
    %v2038 = vmax.f32 %v2006, 0.0
    %v2039 = vmax.f32 %v2007, 0.0
    %v2040 = vmax.f32 %v2008, 0.0
    %v2041 = vmax.f32 %v2009, 0.0
    %v2042 = vmax.f32 %v2010, 0.0
    %v2043 = vmax.f32 %v2011, 0.0
    %v2044 = vmax.f32 %v2012, 0.0
    %v2045 = vmax.f32 %v2013, 0.0
    %v2046 = vmax.f32 %v2014, 0.0
    %v2047 = vmax.f32 %v2015, 0.0
    %v2048 = vmax.f32 %v2016, 0.0
    %v2049 = vmax.f32 %v2017, 0.0
    %v2050 = vmax.f32 %v2018, 0.0
    %v2051 = vmax.f32 %v2019, 0.0
    %v2052 = vmax.f32 %v2020, 0.0
    %v2053 = vmax.f32 %v2021, 0.0
    %v2054 = vmax.f32 %v2022, 0.0
    %v2055 = vmax.f32 %v2023, 0.0
    %v2056 = vmax.f32 %v2024, 0.0
    %v2057 = vmax.f32 %v2025, 0.0
    %v2058 = vmax.f32 %v2026, 0.0
    %v2059 = vmax.f32 %v2027, 0.0
    %v2060 = vmax.f32 %v2028, 0.0
    %v2061 = vmax.f32 %v2029, 0.0
    %v2062 = vmax.f32 %v2030, 0.0
    %v2063 = vmax.f32 %v2031, 0.0
    %v2064 = vmax.f32 %v2032, 0.0
    %v2065 = vmax.f32 %v2033, 0.0
    %v2066 = vmax.f32 %v2034, 0.0
    %v2067 = vmax.f32 %v2035, 0.0
    %v2068 = vmax.f32 %v2036, 0.0
    %v2069 = vmax.f32 %v2037, 0.0
    %v2070 = vpack.c.bf16 %v2039, %v2038
    %v2071 = vpack.c.bf16 %v2041, %v2040
    %v2072 = vpack.c.bf16 %v2043, %v2042
    %v2073 = vpack.c.bf16 %v2045, %v2044
    %v2074 = vpack.c.bf16 %v2047, %v2046
    %v2075 = vpack.c.bf16 %v2049, %v2048
    %v2076 = vpack.c.bf16 %v2051, %v2050
    %v2077 = vpack.c.bf16 %v2053, %v2052
    %v2078 = vpack.c.bf16 %v2055, %v2054
    %v2079 = vpack.c.bf16 %v2057, %v2056
    %v2080 = vpack.c.bf16 %v2059, %v2058
    %v2081 = vpack.c.bf16 %v2061, %v2060
    %v2082 = vpack.c.bf16 %v2063, %v2062
    %v2083 = vpack.c.bf16 %v2065, %v2064
    %v2084 = vpack.c.bf16 %v2067, %v2066
    %v2085 = vpack.c.bf16 %v2069, %v2068
    %v2086 = vld [vmem:[#allocation5] sm:$0xf]
    %v2087 = vld [vmem:[#allocation5 + $0x4] sm:$0xf]
    %v2088 = vld [vmem:[#allocation5 + $0x8] sm:$0xf]
    %v2089 = vld [vmem:[#allocation5 + $0xc] sm:$0xf]
    %v2090 = vld [vmem:[#allocation5 + $0x10] sm:$0xf]
    %v2091 = vld [vmem:[#allocation5 + $0x14] sm:$0xf]
    %v2092 = vld [vmem:[#allocation5 + $0x18] sm:$0xf]
    %v2093 = vld [vmem:[#allocation5 + $0x1c] sm:$0xf]
    %v2094 = vld [vmem:[#allocation5 + $0x20] sm:$0xf]
    %v2095 = vld [vmem:[#allocation5 + $0x24] sm:$0xf]
    %v2096 = vld [vmem:[#allocation5 + $0x28] sm:$0xf]
    %v2097 = vld [vmem:[#allocation5 + $0x2c] sm:$0xf]
    %v2098 = vld [vmem:[#allocation5 + $0x30] sm:$0xf]
    %v2099 = vld [vmem:[#allocation5 + $0x34] sm:$0xf]
    %v2100 = vld [vmem:[#allocation5 + $0x38] sm:$0xf]
    %v2101 = vld [vmem:[#allocation5 + $0x3c] sm:$0xf]
    %v2118 = vunpack.c.l.b16 %v2086
    %v2119 = vunpack.c.l.b16 %v2087
    %v2120 = vunpack.c.l.b16 %v2088
    %v2121 = vunpack.c.l.b16 %v2089
    %v2122 = vunpack.c.l.b16 %v2090
    %v2123 = vunpack.c.l.b16 %v2091
    %v2124 = vunpack.c.l.b16 %v2092
    %v2125 = vunpack.c.l.b16 %v2093
    %v2126 = vunpack.c.l.b16 %v2094
    %v2127 = vunpack.c.l.b16 %v2095
    %v2128 = vunpack.c.l.b16 %v2096
    %v2129 = vunpack.c.l.b16 %v2097
    %v2130 = vunpack.c.l.b16 %v2098
    %v2131 = vunpack.c.l.b16 %v2099
    %v2132 = vunpack.c.l.b16 %v2100
    %v2133 = vunpack.c.l.b16 %v2101
    %v2134 = vpack.c.b16 %v2119, %v2118
    %v2135 = vpack.c.b16 %v2121, %v2120
    %v2136 = vpack.c.b16 %v2123, %v2122
    %v2137 = vpack.c.b16 %v2125, %v2124
    %v2138 = vpack.c.b16 %v2127, %v2126
    %v2139 = vpack.c.b16 %v2129, %v2128
    %v2140 = vpack.c.b16 %v2131, %v2130
    %v2141 = vpack.c.b16 %v2133, %v2132
    %2150 = vmatpush.bf16.msra.mxu0 %v2141
    %2151 = vmatpush.bf16.msra.mxu0 %v2140
    %2152 = vmatpush.bf16.msra.mxu0 %v2139
    %2153 = vmatpush.bf16.msra.mxu0 %v2138
    %2154 = vmatpush.bf16.msra.mxu0 %v2137
    %2155 = vmatpush.bf16.msra.mxu0 %v2136
    %2156 = vmatpush.bf16.msra.mxu0 %v2135
    %2157 = vmatpush.bf16.msra.mxu0 %v2134
    %2158 = vmatmul.bf16.gmra.mxu0 %v2070
    %v2159 = vpop.f32.mrf.mxu0
    %v2160 = vadd.f32 0.0, %v2159
    %v2161 = vpop.f32.mrf.mxu0
    %v2162 = vadd.f32 0.0, %v2161
    %2163 = vmatmul.bf16.gmra.mxu0 %v2071
    %v2164 = vpop.f32.mrf.mxu0
    %v2165 = vadd.f32 0.0, %v2164
    %v2166 = vpop.f32.mrf.mxu0
    %v2167 = vadd.f32 0.0, %v2166
    %2168 = vmatmul.bf16.gmra.mxu0 %v2072
    %v2169 = vpop.f32.mrf.mxu0
    %v2170 = vadd.f32 0.0, %v2169
    %v2171 = vpop.f32.mrf.mxu0
    %v2172 = vadd.f32 0.0, %v2171
    %2173 = vmatmul.bf16.gmra.mxu0 %v2073
    %v2174 = vpop.f32.mrf.mxu0
    %v2175 = vadd.f32 0.0, %v2174
    %v2176 = vpop.f32.mrf.mxu0
    %v2177 = vadd.f32 0.0, %v2176
    %2178 = vmatmul.bf16.gmra.mxu0 %v2074
    %v2179 = vpop.f32.mrf.mxu0
    %v2180 = vadd.f32 0.0, %v2179
    %v2181 = vpop.f32.mrf.mxu0
    %v2182 = vadd.f32 0.0, %v2181
    %2183 = vmatmul.bf16.gmra.mxu0 %v2075
    %v2184 = vpop.f32.mrf.mxu0
    %v2185 = vadd.f32 0.0, %v2184
    %v2186 = vpop.f32.mrf.mxu0
    %v2187 = vadd.f32 0.0, %v2186
    %2188 = vmatmul.bf16.gmra.mxu0 %v2076
    %v2189 = vpop.f32.mrf.mxu0
    %v2190 = vadd.f32 0.0, %v2189
    %v2191 = vpop.f32.mrf.mxu0
    %v2192 = vadd.f32 0.0, %v2191
    %2193 = vmatmul.bf16.gmra.mxu0 %v2077
    %v2194 = vpop.f32.mrf.mxu0
    %v2195 = vadd.f32 0.0, %v2194
    %v2196 = vpop.f32.mrf.mxu0
    %v2197 = vadd.f32 0.0, %v2196
    %2198 = vmatmul.bf16.gmra.mxu0 %v2078
    %v2199 = vpop.f32.mrf.mxu0
    %v2200 = vadd.f32 0.0, %v2199
    %v2201 = vpop.f32.mrf.mxu0
    %v2202 = vadd.f32 0.0, %v2201
    %2203 = vmatmul.bf16.gmra.mxu0 %v2079
    %v2204 = vpop.f32.mrf.mxu0
    %v2205 = vadd.f32 0.0, %v2204
    %v2206 = vpop.f32.mrf.mxu0
    %v2207 = vadd.f32 0.0, %v2206
    %2208 = vmatmul.bf16.gmra.mxu0 %v2080
    %v2209 = vpop.f32.mrf.mxu0
    %v2210 = vadd.f32 0.0, %v2209
    %v2211 = vpop.f32.mrf.mxu0
    %v2212 = vadd.f32 0.0, %v2211
    %2213 = vmatmul.bf16.gmra.mxu0 %v2081
    %v2214 = vpop.f32.mrf.mxu0
    %v2215 = vadd.f32 0.0, %v2214
    %v2216 = vpop.f32.mrf.mxu0
    %v2217 = vadd.f32 0.0, %v2216
    %2218 = vmatmul.bf16.gmra.mxu0 %v2082
    %v2219 = vpop.f32.mrf.mxu0
    %v2220 = vadd.f32 0.0, %v2219
    %v2221 = vpop.f32.mrf.mxu0
    %v2222 = vadd.f32 0.0, %v2221
    %2223 = vmatmul.bf16.gmra.mxu0 %v2083
    %v2224 = vpop.f32.mrf.mxu0
    %v2225 = vadd.f32 0.0, %v2224
    %v2226 = vpop.f32.mrf.mxu0
    %v2227 = vadd.f32 0.0, %v2226
    %2228 = vmatmul.bf16.gmra.mxu0 %v2084
    %v2229 = vpop.f32.mrf.mxu0
    %v2230 = vadd.f32 0.0, %v2229
    %v2231 = vpop.f32.mrf.mxu0
    %v2232 = vadd.f32 0.0, %v2231
    %2233 = vmatmul.bf16.gmra.mxu0 %v2085
    %v2234 = vpop.f32.mrf.mxu0
    %v2235 = vadd.f32 0.0, %v2234
    %v2236 = vpop.f32.mrf.mxu0
    %v2237 = vadd.f32 0.0, %v2236
    %2238 = vdwg.mxu0
    %v2239 = vld [vmem:[%s8] sm:$0x1]
    %v2240 = vld [vmem:[%s9] sm:$0x1]
    %v2241 = vadd.f32 %v2160, %v2162
    %v2242 = vadd.f32 %v2241, %v2165
    %v2243 = vadd.f32 %v2242, %v2167
    %v2244 = vadd.f32 %v2243, %v2170
    %v2245 = vadd.f32 %v2244, %v2172
    %v2246 = vadd.f32 %v2245, %v2175
    %v2247 = vadd.f32 %v2246, %v2177
    %v2248 = vadd.f32 %v2247, %v2180
    %v2249 = vadd.f32 %v2248, %v2182
    %v2250 = vadd.f32 %v2249, %v2185
    %v2251 = vadd.f32 %v2250, %v2187
    %v2252 = vadd.f32 %v2251, %v2190
    %v2253 = vadd.f32 %v2252, %v2192
    %v2254 = vadd.f32 %v2253, %v2195
    %v2255 = vadd.f32 %v2254, %v2197
    %v2256 = vadd.f32 %v2255, %v2200
    %v2257 = vadd.f32 %v2256, %v2202
    %v2258 = vadd.f32 %v2257, %v2205
    %v2259 = vadd.f32 %v2258, %v2207
    %v2260 = vadd.f32 %v2259, %v2210
    %v2261 = vadd.f32 %v2260, %v2212
    %v2262 = vadd.f32 %v2261, %v2215
    %v2263 = vadd.f32 %v2262, %v2217
    %v2264 = vadd.f32 %v2263, %v2220
    %v2265 = vadd.f32 %v2264, %v2222
    %v2266 = vadd.f32 %v2265, %v2225
    %v2267 = vadd.f32 %v2266, %v2227
    %v2268 = vadd.f32 %v2267, %v2230
    %v2269 = vadd.f32 %v2268, %v2232
    %v2270 = vadd.f32 %v2269, %v2235
    %v2271 = vadd.f32 %v2270, %v2237
    %v2272 = vrot.slane %v2271, 4
    %v2273 = vadd.f32 %v2271, %v2272
    %v2274 = vrot.slane %v2273, 2
    %v2275 = vadd.f32 %v2273, %v2274
    %v2276 = vrot.slane %v2275, 1
    %v2277 = vadd.f32 %v2275, %v2276
    %v2278 = vmul.f32 %v2160, %v2160
    %v2279 = vmul.f32 %v2162, %v2162
    %v2280 = vmul.f32 %v2165, %v2165
    %v2281 = vmul.f32 %v2167, %v2167
    %v2282 = vmul.f32 %v2170, %v2170
    %v2283 = vmul.f32 %v2172, %v2172
    %v2284 = vmul.f32 %v2175, %v2175
    %v2285 = vmul.f32 %v2177, %v2177
    %v2286 = vmul.f32 %v2180, %v2180
    %v2287 = vmul.f32 %v2182, %v2182
    %v2288 = vmul.f32 %v2185, %v2185
    %v2289 = vmul.f32 %v2187, %v2187
    %v2290 = vmul.f32 %v2190, %v2190
    %v2291 = vmul.f32 %v2192, %v2192
    %v2292 = vmul.f32 %v2195, %v2195
    %v2293 = vmul.f32 %v2197, %v2197
    %v2294 = vmul.f32 %v2200, %v2200
    %v2295 = vmul.f32 %v2202, %v2202
    %v2296 = vmul.f32 %v2205, %v2205
    %v2297 = vmul.f32 %v2207, %v2207
    %v2298 = vmul.f32 %v2210, %v2210
    %v2299 = vmul.f32 %v2212, %v2212
    %v2300 = vmul.f32 %v2215, %v2215
    %v2301 = vmul.f32 %v2217, %v2217
    %v2302 = vmul.f32 %v2220, %v2220
    %v2303 = vmul.f32 %v2222, %v2222
    %v2304 = vmul.f32 %v2225, %v2225
    %v2305 = vmul.f32 %v2227, %v2227
    %v2306 = vmul.f32 %v2230, %v2230
    %v2307 = vmul.f32 %v2232, %v2232
    %v2308 = vmul.f32 %v2235, %v2235
    %v2309 = vmul.f32 %v2237, %v2237
    %v2310 = vadd.f32 %v2278, %v2279
    %v2311 = vadd.f32 %v2310, %v2280
    %v2312 = vadd.f32 %v2311, %v2281
    %v2313 = vadd.f32 %v2312, %v2282
    %v2314 = vadd.f32 %v2313, %v2283
    %v2315 = vadd.f32 %v2314, %v2284
    %v2316 = vadd.f32 %v2315, %v2285
    %v2317 = vadd.f32 %v2316, %v2286
    %v2318 = vadd.f32 %v2317, %v2287
    %v2319 = vadd.f32 %v2318, %v2288
    %v2320 = vadd.f32 %v2319, %v2289
    %v2321 = vadd.f32 %v2320, %v2290
    %v2322 = vadd.f32 %v2321, %v2291
    %v2323 = vadd.f32 %v2322, %v2292
    %v2324 = vadd.f32 %v2323, %v2293
    %v2325 = vadd.f32 %v2324, %v2294
    %v2326 = vadd.f32 %v2325, %v2295
    %v2327 = vadd.f32 %v2326, %v2296
    %v2328 = vadd.f32 %v2327, %v2297
    %v2329 = vadd.f32 %v2328, %v2298
    %v2330 = vadd.f32 %v2329, %v2299
    %v2331 = vadd.f32 %v2330, %v2300
    %v2332 = vadd.f32 %v2331, %v2301
    %v2333 = vadd.f32 %v2332, %v2302
    %v2334 = vadd.f32 %v2333, %v2303
    %v2335 = vadd.f32 %v2334, %v2304
    %v2336 = vadd.f32 %v2335, %v2305
    %v2337 = vadd.f32 %v2336, %v2306
    %v2338 = vadd.f32 %v2337, %v2307
    %v2339 = vadd.f32 %v2338, %v2308
    %v2340 = vadd.f32 %v2339, %v2309
    %v2341 = vrot.slane %v2340, 4
    %v2342 = vadd.f32 %v2340, %v2341
    %v2343 = vrot.slane %v2342, 2
    %v2344 = vadd.f32 %v2342, %v2343
    %v2345 = vrot.slane %v2344, 1
    %v2346 = vadd.f32 %v2344, %v2345
    %v2347 = vmul.f32 %v2277, 0.00390625
    %v2348 = vmul.f32 %v2346, 0.00390625
    %v2349 = vmul.f32 %v2347, %v2347
    %v2350 = vsub.f32 %v2348, %v2349
    %v2351 = vmax.f32 %v2350, 0.0
    %v2352 = vadd.f32 %v2351, 1e-05
    %v2353 = vrsqrt.pop %v2352
    %v2354 = vmul.f32 %v2353, %v2352
    %v2355 = vmul.f32 %v2354, %v2353
    %v2356 = vmul.f32 0.5, %v2355
    %v2357 = vsub.f32 1.5, %v2356
    %v2358 = vmul.f32 %v2353, %v2357
    %vm2359 = vweird.f32 %v2352
    %vm2360 = vweird.f32 %v2353
    %vm2361 = vmor %vm2359, %vm2360
    %v2362 = vsel %vm2361, %v2353, %v2358
    %v2363 = vmul.f32 %v2239, %v2362
    %v2364 = vmul.f32 %v2347, %v2363
    %v2365 = vsub.f32 %v2240, %v2364
    %v2366 = vld [vmem:[%s10] sm:$0x1]
    %v2367 = vld [vmem:[%s11] sm:$0x1]
    %v2368 = vadd.f32 %v383, %v385
    %v2369 = vadd.f32 %v2368, %v388
    %v2370 = vadd.f32 %v2369, %v390
    %v2371 = vadd.f32 %v2370, %v393
    %v2372 = vadd.f32 %v2371, %v395
    %v2373 = vadd.f32 %v2372, %v398
    %v2374 = vadd.f32 %v2373, %v400
    %v2375 = vadd.f32 %v2374, %v403
    %v2376 = vadd.f32 %v2375, %v405
    %v2377 = vadd.f32 %v2376, %v408
    %v2378 = vadd.f32 %v2377, %v410
    %v2379 = vadd.f32 %v2378, %v413
    %v2380 = vadd.f32 %v2379, %v415
    %v2381 = vadd.f32 %v2380, %v418
    %v2382 = vadd.f32 %v2381, %v420
    %v2383 = vadd.f32 %v2382, %v423
    %v2384 = vadd.f32 %v2383, %v425
    %v2385 = vadd.f32 %v2384, %v428
    %v2386 = vadd.f32 %v2385, %v430
    %v2387 = vadd.f32 %v2386, %v433
    %v2388 = vadd.f32 %v2387, %v435
    %v2389 = vadd.f32 %v2388, %v438
    %v2390 = vadd.f32 %v2389, %v440
    %v2391 = vadd.f32 %v2390, %v443
    %v2392 = vadd.f32 %v2391, %v445
    %v2393 = vadd.f32 %v2392, %v448
    %v2394 = vadd.f32 %v2393, %v450
    %v2395 = vadd.f32 %v2394, %v453
    %v2396 = vadd.f32 %v2395, %v455
    %v2397 = vadd.f32 %v2396, %v458
    %v2398 = vadd.f32 %v2397, %v460
    %v2399 = vrot.slane %v2398, 4
    %v2400 = vadd.f32 %v2398, %v2399
    %v2401 = vrot.slane %v2400, 2
    %v2402 = vadd.f32 %v2400, %v2401
    %v2403 = vrot.slane %v2402, 1
    %v2404 = vadd.f32 %v2402, %v2403
    %v2405 = vmul.f32 %v383, %v383
    %v2406 = vmul.f32 %v385, %v385
    %v2407 = vmul.f32 %v388, %v388
    %v2408 = vmul.f32 %v390, %v390
    %v2409 = vmul.f32 %v393, %v393
    %v2410 = vmul.f32 %v395, %v395
    %v2411 = vmul.f32 %v398, %v398
    %v2412 = vmul.f32 %v400, %v400
    %v2413 = vmul.f32 %v403, %v403
    %v2414 = vmul.f32 %v405, %v405
    %v2415 = vmul.f32 %v408, %v408
    %v2416 = vmul.f32 %v410, %v410
    %v2417 = vmul.f32 %v413, %v413
    %v2418 = vmul.f32 %v415, %v415
    %v2419 = vmul.f32 %v418, %v418
    %v2420 = vmul.f32 %v420, %v420
    %v2421 = vmul.f32 %v423, %v423
    %v2422 = vmul.f32 %v425, %v425
    %v2423 = vmul.f32 %v428, %v428
    %v2424 = vmul.f32 %v430, %v430
    %v2425 = vmul.f32 %v433, %v433
    %v2426 = vmul.f32 %v435, %v435
    %v2427 = vmul.f32 %v438, %v438
    %v2428 = vmul.f32 %v440, %v440
    %v2429 = vmul.f32 %v443, %v443
    %v2430 = vmul.f32 %v445, %v445
    %v2431 = vmul.f32 %v448, %v448
    %v2432 = vmul.f32 %v450, %v450
    %v2433 = vmul.f32 %v453, %v453
    %v2434 = vmul.f32 %v455, %v455
    %v2435 = vmul.f32 %v458, %v458
    %v2436 = vmul.f32 %v460, %v460
    %v2437 = vadd.f32 %v2405, %v2406
    %v2438 = vadd.f32 %v2437, %v2407
    %v2439 = vadd.f32 %v2438, %v2408
    %v2440 = vadd.f32 %v2439, %v2409
    %v2441 = vadd.f32 %v2440, %v2410
    %v2442 = vadd.f32 %v2441, %v2411
    %v2443 = vadd.f32 %v2442, %v2412
    %v2444 = vadd.f32 %v2443, %v2413
    %v2445 = vadd.f32 %v2444, %v2414
    %v2446 = vadd.f32 %v2445, %v2415
    %v2447 = vadd.f32 %v2446, %v2416
    %v2448 = vadd.f32 %v2447, %v2417
    %v2449 = vadd.f32 %v2448, %v2418
    %v2450 = vadd.f32 %v2449, %v2419
    %v2451 = vadd.f32 %v2450, %v2420
    %v2452 = vadd.f32 %v2451, %v2421
    %v2453 = vadd.f32 %v2452, %v2422
    %v2454 = vadd.f32 %v2453, %v2423
    %v2455 = vadd.f32 %v2454, %v2424
    %v2456 = vadd.f32 %v2455, %v2425
    %v2457 = vadd.f32 %v2456, %v2426
    %v2458 = vadd.f32 %v2457, %v2427
    %v2459 = vadd.f32 %v2458, %v2428
    %v2460 = vadd.f32 %v2459, %v2429
    %v2461 = vadd.f32 %v2460, %v2430
    %v2462 = vadd.f32 %v2461, %v2431
    %v2463 = vadd.f32 %v2462, %v2432
    %v2464 = vadd.f32 %v2463, %v2433
    %v2465 = vadd.f32 %v2464, %v2434
    %v2466 = vadd.f32 %v2465, %v2435
    %v2467 = vadd.f32 %v2466, %v2436
    %v2468 = vrot.slane %v2467, 4
    %v2469 = vadd.f32 %v2467, %v2468
    %v2470 = vrot.slane %v2469, 2
    %v2471 = vadd.f32 %v2469, %v2470
    %v2472 = vrot.slane %v2471, 1
    %v2473 = vadd.f32 %v2471, %v2472
    %v2474 = vmul.f32 %v2404, 0.00390625
    %v2475 = vmul.f32 %v2473, 0.00390625
    %v2476 = vmul.f32 %v2474, %v2474
    %v2477 = vsub.f32 %v2475, %v2476
    %v2478 = vmax.f32 %v2477, 0.0
    %v2479 = vadd.f32 %v2478, 1e-05
    %v2480 = vrsqrt.pop %v2479
    %v2481 = vmul.f32 %v2480, %v2479
    %v2482 = vmul.f32 %v2481, %v2480
    %v2483 = vmul.f32 0.5, %v2482
    %v2484 = vsub.f32 1.5, %v2483
    %v2485 = vmul.f32 %v2480, %v2484
    %vm2486 = vweird.f32 %v2479
    %vm2487 = vweird.f32 %v2480
    %vm2488 = vmor %vm2486, %vm2487
    %v2489 = vsel %vm2488, %v2480, %v2485
    %v2490 = vmul.f32 %v2366, %v2489
    %v2491 = vmul.f32 %v2474, %v2490
    %v2492 = vsub.f32 %v2367, %v2491
    %v2494 = vperm.slane %v2363, 0
    %v2496 = vmul.f32 %v2160, %v2494
    %v2497 = vmul.f32 %v2162, %v2494
    %v2498 = vmul.f32 %v2165, %v2494
    %v2499 = vmul.f32 %v2167, %v2494
    %v2500 = vmul.f32 %v2170, %v2494
    %v2501 = vmul.f32 %v2172, %v2494
    %v2502 = vmul.f32 %v2175, %v2494
    %v2503 = vmul.f32 %v2177, %v2494
    %v2504 = vmul.f32 %v2180, %v2494
    %v2505 = vmul.f32 %v2182, %v2494
    %v2506 = vmul.f32 %v2185, %v2494
    %v2507 = vmul.f32 %v2187, %v2494
    %v2508 = vmul.f32 %v2190, %v2494
    %v2509 = vmul.f32 %v2192, %v2494
    %v2510 = vmul.f32 %v2195, %v2494
    %v2511 = vmul.f32 %v2197, %v2494
    %v2512 = vmul.f32 %v2200, %v2494
    %v2513 = vmul.f32 %v2202, %v2494
    %v2514 = vmul.f32 %v2205, %v2494
    %v2515 = vmul.f32 %v2207, %v2494
    %v2516 = vmul.f32 %v2210, %v2494
    %v2517 = vmul.f32 %v2212, %v2494
    %v2518 = vmul.f32 %v2215, %v2494
    %v2519 = vmul.f32 %v2217, %v2494
    %v2520 = vmul.f32 %v2220, %v2494
    %v2521 = vmul.f32 %v2222, %v2494
    %v2522 = vmul.f32 %v2225, %v2494
    %v2523 = vmul.f32 %v2227, %v2494
    %v2524 = vmul.f32 %v2230, %v2494
    %v2525 = vmul.f32 %v2232, %v2494
    %v2526 = vmul.f32 %v2235, %v2494
    %v2527 = vmul.f32 %v2237, %v2494
    %v2529 = vperm.slane %v2365, 0
    %v2531 = vadd.f32 %v2496, %v2529
    %v2532 = vadd.f32 %v2497, %v2529
    %v2533 = vadd.f32 %v2498, %v2529
    %v2534 = vadd.f32 %v2499, %v2529
    %v2535 = vadd.f32 %v2500, %v2529
    %v2536 = vadd.f32 %v2501, %v2529
    %v2537 = vadd.f32 %v2502, %v2529
    %v2538 = vadd.f32 %v2503, %v2529
    %v2539 = vadd.f32 %v2504, %v2529
    %v2540 = vadd.f32 %v2505, %v2529
    %v2541 = vadd.f32 %v2506, %v2529
    %v2542 = vadd.f32 %v2507, %v2529
    %v2543 = vadd.f32 %v2508, %v2529
    %v2544 = vadd.f32 %v2509, %v2529
    %v2545 = vadd.f32 %v2510, %v2529
    %v2546 = vadd.f32 %v2511, %v2529
    %v2547 = vadd.f32 %v2512, %v2529
    %v2548 = vadd.f32 %v2513, %v2529
    %v2549 = vadd.f32 %v2514, %v2529
    %v2550 = vadd.f32 %v2515, %v2529
    %v2551 = vadd.f32 %v2516, %v2529
    %v2552 = vadd.f32 %v2517, %v2529
    %v2553 = vadd.f32 %v2518, %v2529
    %v2554 = vadd.f32 %v2519, %v2529
    %v2555 = vadd.f32 %v2520, %v2529
    %v2556 = vadd.f32 %v2521, %v2529
    %v2557 = vadd.f32 %v2522, %v2529
    %v2558 = vadd.f32 %v2523, %v2529
    %v2559 = vadd.f32 %v2524, %v2529
    %v2560 = vadd.f32 %v2525, %v2529
    %v2561 = vadd.f32 %v2526, %v2529
    %v2562 = vadd.f32 %v2527, %v2529
    %v2564 = vperm.slane %v2490, 0
    %v2566 = vmul.f32 %v383, %v2564
    %v2567 = vmul.f32 %v385, %v2564
    %v2568 = vmul.f32 %v388, %v2564
    %v2569 = vmul.f32 %v390, %v2564
    %v2570 = vmul.f32 %v393, %v2564
    %v2571 = vmul.f32 %v395, %v2564
    %v2572 = vmul.f32 %v398, %v2564
    %v2573 = vmul.f32 %v400, %v2564
    %v2574 = vmul.f32 %v403, %v2564
    %v2575 = vmul.f32 %v405, %v2564
    %v2576 = vmul.f32 %v408, %v2564
    %v2577 = vmul.f32 %v410, %v2564
    %v2578 = vmul.f32 %v413, %v2564
    %v2579 = vmul.f32 %v415, %v2564
    %v2580 = vmul.f32 %v418, %v2564
    %v2581 = vmul.f32 %v420, %v2564
    %v2582 = vmul.f32 %v423, %v2564
    %v2583 = vmul.f32 %v425, %v2564
    %v2584 = vmul.f32 %v428, %v2564
    %v2585 = vmul.f32 %v430, %v2564
    %v2586 = vmul.f32 %v433, %v2564
    %v2587 = vmul.f32 %v435, %v2564
    %v2588 = vmul.f32 %v438, %v2564
    %v2589 = vmul.f32 %v440, %v2564
    %v2590 = vmul.f32 %v443, %v2564
    %v2591 = vmul.f32 %v445, %v2564
    %v2592 = vmul.f32 %v448, %v2564
    %v2593 = vmul.f32 %v450, %v2564
    %v2594 = vmul.f32 %v453, %v2564
    %v2595 = vmul.f32 %v455, %v2564
    %v2596 = vmul.f32 %v458, %v2564
    %v2597 = vmul.f32 %v460, %v2564
    %v2599 = vperm.slane %v2492, 0
    %v2601 = vadd.f32 %v2566, %v2599
    %v2602 = vadd.f32 %v2567, %v2599
    %v2603 = vadd.f32 %v2568, %v2599
    %v2604 = vadd.f32 %v2569, %v2599
    %v2605 = vadd.f32 %v2570, %v2599
    %v2606 = vadd.f32 %v2571, %v2599
    %v2607 = vadd.f32 %v2572, %v2599
    %v2608 = vadd.f32 %v2573, %v2599
    %v2609 = vadd.f32 %v2574, %v2599
    %v2610 = vadd.f32 %v2575, %v2599
    %v2611 = vadd.f32 %v2576, %v2599
    %v2612 = vadd.f32 %v2577, %v2599
    %v2613 = vadd.f32 %v2578, %v2599
    %v2614 = vadd.f32 %v2579, %v2599
    %v2615 = vadd.f32 %v2580, %v2599
    %v2616 = vadd.f32 %v2581, %v2599
    %v2617 = vadd.f32 %v2582, %v2599
    %v2618 = vadd.f32 %v2583, %v2599
    %v2619 = vadd.f32 %v2584, %v2599
    %v2620 = vadd.f32 %v2585, %v2599
    %v2621 = vadd.f32 %v2586, %v2599
    %v2622 = vadd.f32 %v2587, %v2599
    %v2623 = vadd.f32 %v2588, %v2599
    %v2624 = vadd.f32 %v2589, %v2599
    %v2625 = vadd.f32 %v2590, %v2599
    %v2626 = vadd.f32 %v2591, %v2599
    %v2627 = vadd.f32 %v2592, %v2599
    %v2628 = vadd.f32 %v2593, %v2599
    %v2629 = vadd.f32 %v2594, %v2599
    %v2630 = vadd.f32 %v2595, %v2599
    %v2631 = vadd.f32 %v2596, %v2599
    %v2632 = vadd.f32 %v2597, %v2599
    %v2633 = vadd.f32 %v2531, %v2601
    %v2634 = vadd.f32 %v2532, %v2602
    %v2635 = vadd.f32 %v2533, %v2603
    %v2636 = vadd.f32 %v2534, %v2604
    %v2637 = vadd.f32 %v2535, %v2605
    %v2638 = vadd.f32 %v2536, %v2606
    %v2639 = vadd.f32 %v2537, %v2607
    %v2640 = vadd.f32 %v2538, %v2608
    %v2641 = vadd.f32 %v2539, %v2609
    %v2642 = vadd.f32 %v2540, %v2610
    %v2643 = vadd.f32 %v2541, %v2611
    %v2644 = vadd.f32 %v2542, %v2612
    %v2645 = vadd.f32 %v2543, %v2613
    %v2646 = vadd.f32 %v2544, %v2614
    %v2647 = vadd.f32 %v2545, %v2615
    %v2648 = vadd.f32 %v2546, %v2616
    %v2649 = vadd.f32 %v2547, %v2617
    %v2650 = vadd.f32 %v2548, %v2618
    %v2651 = vadd.f32 %v2549, %v2619
    %v2652 = vadd.f32 %v2550, %v2620
    %v2653 = vadd.f32 %v2551, %v2621
    %v2654 = vadd.f32 %v2552, %v2622
    %v2655 = vadd.f32 %v2553, %v2623
    %v2656 = vadd.f32 %v2554, %v2624
    %v2657 = vadd.f32 %v2555, %v2625
    %v2658 = vadd.f32 %v2556, %v2626
    %v2659 = vadd.f32 %v2557, %v2627
    %v2660 = vadd.f32 %v2558, %v2628
    %v2661 = vadd.f32 %v2559, %v2629
    %v2662 = vadd.f32 %v2560, %v2630
    %v2663 = vadd.f32 %v2561, %v2631
    %v2664 = vadd.f32 %v2562, %v2632
    %v2665 = vmax.f32 %v2633, 0.0
    %v2666 = vmax.f32 %v2634, 0.0
    %v2667 = vmax.f32 %v2635, 0.0
    %v2668 = vmax.f32 %v2636, 0.0
    %v2669 = vmax.f32 %v2637, 0.0
    %v2670 = vmax.f32 %v2638, 0.0
    %v2671 = vmax.f32 %v2639, 0.0
    %v2672 = vmax.f32 %v2640, 0.0
    %v2673 = vmax.f32 %v2641, 0.0
    %v2674 = vmax.f32 %v2642, 0.0
    %v2675 = vmax.f32 %v2643, 0.0
    %v2676 = vmax.f32 %v2644, 0.0
    %v2677 = vmax.f32 %v2645, 0.0
    %v2678 = vmax.f32 %v2646, 0.0
    %v2679 = vmax.f32 %v2647, 0.0
    %v2680 = vmax.f32 %v2648, 0.0
    %v2681 = vmax.f32 %v2649, 0.0
    %v2682 = vmax.f32 %v2650, 0.0
    %v2683 = vmax.f32 %v2651, 0.0
    %v2684 = vmax.f32 %v2652, 0.0
    %v2685 = vmax.f32 %v2653, 0.0
    %v2686 = vmax.f32 %v2654, 0.0
    %v2687 = vmax.f32 %v2655, 0.0
    %v2688 = vmax.f32 %v2656, 0.0
    %v2689 = vmax.f32 %v2657, 0.0
    %v2690 = vmax.f32 %v2658, 0.0
    %v2691 = vmax.f32 %v2659, 0.0
    %v2692 = vmax.f32 %v2660, 0.0
    %v2693 = vmax.f32 %v2661, 0.0
    %v2694 = vmax.f32 %v2662, 0.0
    %v2695 = vmax.f32 %v2663, 0.0
    %v2696 = vmax.f32 %v2664, 0.0
    %v2697 = vpack.c.bf16 %v2665, %v2665
    %v2698 = vpack.c.bf16 %v2666, %v2666
    %v2699 = vpack.c.bf16 %v2667, %v2667
    %v2700 = vpack.c.bf16 %v2668, %v2668
    %v2701 = vpack.c.bf16 %v2669, %v2669
    %v2702 = vpack.c.bf16 %v2670, %v2670
    %v2703 = vpack.c.bf16 %v2671, %v2671
    %v2704 = vpack.c.bf16 %v2672, %v2672
    %v2705 = vpack.c.bf16 %v2673, %v2673
    %v2706 = vpack.c.bf16 %v2674, %v2674
    %v2707 = vpack.c.bf16 %v2675, %v2675
    %v2708 = vpack.c.bf16 %v2676, %v2676
    %v2709 = vpack.c.bf16 %v2677, %v2677
    %v2710 = vpack.c.bf16 %v2678, %v2678
    %v2711 = vpack.c.bf16 %v2679, %v2679
    %v2712 = vpack.c.bf16 %v2680, %v2680
    %v2713 = vpack.c.bf16 %v2681, %v2681
    %v2714 = vpack.c.bf16 %v2682, %v2682
    %v2715 = vpack.c.bf16 %v2683, %v2683
    %v2716 = vpack.c.bf16 %v2684, %v2684
    %v2717 = vpack.c.bf16 %v2685, %v2685
    %v2718 = vpack.c.bf16 %v2686, %v2686
    %v2719 = vpack.c.bf16 %v2687, %v2687
    %v2720 = vpack.c.bf16 %v2688, %v2688
    %v2721 = vpack.c.bf16 %v2689, %v2689
    %v2722 = vpack.c.bf16 %v2690, %v2690
    %v2723 = vpack.c.bf16 %v2691, %v2691
    %v2724 = vpack.c.bf16 %v2692, %v2692
    %v2725 = vpack.c.bf16 %v2693, %v2693
    %v2726 = vpack.c.bf16 %v2694, %v2694
    %v2727 = vpack.c.bf16 %v2695, %v2695
    %v2728 = vpack.c.bf16 %v2696, %v2696
    %2729 = vst [vmem:[#allocation7] sm:$0xf] %v2697
    %2730 = vst [vmem:[#allocation7 + $0x4] sm:$0xf] %v2698
    %2731 = vst [vmem:[#allocation7 + $0x8] sm:$0xf] %v2699
    %2732 = vst [vmem:[#allocation7 + $0xc] sm:$0xf] %v2700
    %2733 = vst [vmem:[#allocation7 + $0x10] sm:$0xf] %v2701
    %2734 = vst [vmem:[#allocation7 + $0x14] sm:$0xf] %v2702
    %2735 = vst [vmem:[#allocation7 + $0x18] sm:$0xf] %v2703
    %2736 = vst [vmem:[#allocation7 + $0x1c] sm:$0xf] %v2704
    %2737 = vst [vmem:[#allocation7 + $0x20] sm:$0xf] %v2705
    %2738 = vst [vmem:[#allocation7 + $0x24] sm:$0xf] %v2706
    %2739 = vst [vmem:[#allocation7 + $0x28] sm:$0xf] %v2707
    %2740 = vst [vmem:[#allocation7 + $0x2c] sm:$0xf] %v2708
    %2741 = vst [vmem:[#allocation7 + $0x30] sm:$0xf] %v2709
    %2742 = vst [vmem:[#allocation7 + $0x34] sm:$0xf] %v2710
    %2743 = vst [vmem:[#allocation7 + $0x38] sm:$0xf] %v2711
    %2744 = vst [vmem:[#allocation7 + $0x3c] sm:$0xf] %v2712
    %2745 = vst [vmem:[#allocation7 + $0x40] sm:$0xf] %v2713
    %2746 = vst [vmem:[#allocation7 + $0x44] sm:$0xf] %v2714
    %2747 = vst [vmem:[#allocation7 + $0x48] sm:$0xf] %v2715
    %2748 = vst [vmem:[#allocation7 + $0x4c] sm:$0xf] %v2716
    %2749 = vst [vmem:[#allocation7 + $0x50] sm:$0xf] %v2717
    %2750 = vst [vmem:[#allocation7 + $0x54] sm:$0xf] %v2718
    %2751 = vst [vmem:[#allocation7 + $0x58] sm:$0xf] %v2719
    %2752 = vst [vmem:[#allocation7 + $0x5c] sm:$0xf] %v2720
    %2753 = vst [vmem:[#allocation7 + $0x60] sm:$0xf] %v2721
    %2754 = vst [vmem:[#allocation7 + $0x64] sm:$0xf] %v2722
    %2755 = vst [vmem:[#allocation7 + $0x68] sm:$0xf] %v2723
    %2756 = vst [vmem:[#allocation7 + $0x6c] sm:$0xf] %v2724
    %2757 = vst [vmem:[#allocation7 + $0x70] sm:$0xf] %v2725
    %2758 = vst [vmem:[#allocation7 + $0x74] sm:$0xf] %v2726
    %2759 = vst [vmem:[#allocation7 + $0x78] sm:$0xf] %v2727
    %2760 = vst [vmem:[#allocation7 + $0x7c] sm:$0xf] %v2728
    // Predicated region
    $region58: #{tpu_custom_call.1} parent=1 // pred_check
      _
    $region59: #{tpu_custom_call.1} parent=1 // pred_check_branch
      %2762 = sbr.rel (0) target = $region61
    $region60: #{tpu_custom_call.1} parent=1 // pred_region
      %2764 = vsyncadd [#allocation4], 0
      %s2765 = sshll.u32 [#allocation7], 4
      %s2766 = int_to_ptr.vmem [resolvable:$true] %s2765
      %s2767 = sshll.u32 %s12, 4
      %s2768 = int_to_ptr.hbm [resolvable:$true] %s2767
      %2773 = dma.vmem_to_hbm [thread:$0]  %s2766, 2048, %s2768, [#allocation4], 64, 64, 4
    $region61: #{tpu_custom_call.1} parent=1 // pred_fallthru
      _
    // Predicated region
    $region62: #{tpu_custom_call.1} parent=1 // pred_check
      _
    $region63: #{tpu_custom_call.1} parent=1 // pred_check_branch
      %2775 = sbr.rel (0) target = $region65
    $region64: #{tpu_custom_call.1} parent=1 // pred_region
      %2777 = dma.done [#allocation4], 2048
    $region65: #{tpu_custom_call.1} parent=1 // pred_fallthru
      _
    %2778 = vsyncpa [#allocation3], 1
    %2779 = vsyncpa [#allocation6], 1
    %2780 = vsyncpa [#allocation4], 1

</llo_original>
